<compile_context>
chip_gen: v6e
topology: v6e:2x2x1
jax: 0.10.0
libtpu: 0.0.40
codegen_flags: <defaults>
</compile_context>

<pallas_src>
import jax
import jax.numpy as jnp
from jax.experimental import pallas as pl
from jax.experimental.pallas import tpu as pltpu
import numpy as np

_LANE = 128
_SLAB = 8


def _cdiv(a, b):
    return -(-a // b)


def _qlayer_kernel(ht_ref, hw_ref, ct_ref, st_ref, x_ref, rho_ref, out_ref):
    # ht_ref: (D3,) half-theta SMEM          hw_ref: (D,) half-w SMEM
    # ct_ref/st_ref: (D3,) cos/sin(theta/2)  SMEM scalars for tail gates
    # x_ref:  (D, TS, 128) f32 VMEM (batch-last, batch over sublane+lane)
    # rho_ref/out_ref: (8, TS, 128) f32 VMEM (rows 0..3 Re, 4..7 Im)
    D = x_ref.shape[0]
    D3 = ht_ref.shape[0]
    TS = x_ref.shape[1]
    n_slabs = TS // _SLAB  # static

    def gate_coeffs(j0, j1, j2, sl):
        # Row j0 is always batch-dependent: D3 - D <= 2 guarantees 3g <= D-1.
        h0 = ht_ref[j0] + hw_ref[j0] * x_ref[j0, sl, :]
        c = jnp.cos(h0)
        s = jnp.sin(h0)
        if j2 < D:                       # all three rows batch-dependent
            h1 = ht_ref[j1] + hw_ref[j1] * x_ref[j1, sl, :]
            h2 = ht_ref[j2] + hw_ref[j2] * x_ref[j2, sl, :]
            a = h1 + h2
            b = h1 - h2
            ca, sa = jnp.cos(a), jnp.sin(a)
            cb, sb = jnp.cos(b), jnp.sin(b)
        elif j1 < D:                     # j2 is a batch-constant tail gate
            h1 = ht_ref[j1] + hw_ref[j1] * x_ref[j1, sl, :]
            ch1, sh1 = jnp.cos(h1), jnp.sin(h1)
            ct2, st2 = ct_ref[j2], st_ref[j2]           # SMEM scalars
            ca = ch1 * ct2 - sh1 * st2                  # cos(h1 + t2)
            sa = sh1 * ct2 + ch1 * st2                  # sin(h1 + t2)
            cb = ch1 * ct2 + sh1 * st2                  # cos(h1 - t2)
            sb = sh1 * ct2 - ch1 * st2                  # sin(h1 - t2)
        else:                            # j1 and j2 both batch-constant
            ct1, st1 = ct_ref[j1], st_ref[j1]
            ct2, st2 = ct_ref[j2], st_ref[j2]
            ca = ct1 * ct2 - st1 * st2                  # cos(t1 + t2)
            sa = st1 * ct2 + ct1 * st2                  # sin(t1 + t2)
            cb = ct1 * ct2 + st1 * st2                  # cos(t1 - t2)
            sb = st1 * ct2 - ct1 * st2                  # sin(t1 - t2)
        # U = [[ uA + i*uB, -uC - i*uD ], [ uC - i*uD, uA - i*uB ]]
        return c * ca, c * sa, s * cb, s * sb            # uA, uB, uC, uD

    def slab_body(si):
        if isinstance(si, int):
            row0 = si * _SLAB
        else:
            row0 = pl.multiple_of(si * _SLAB, _SLAB)
        sl = pl.ds(row0, _SLAB)

        r00 = rho_ref[0, sl, :]; r01 = rho_ref[1, sl, :]
        r10 = rho_ref[2, sl, :]; r11 = rho_ref[3, sl, :]
        s00 = rho_ref[4, sl, :]; s01 = rho_ref[5, sl, :]
        s10 = rho_ref[6, sl, :]; s11 = rho_ref[7, sl, :]

        for g in range(D3 // 3):
            uA, uB, uC, uD = gate_coeffs(3 * g, 3 * g + 1, 3 * g + 2, sl)

            # M = U @ rho   (complex 2x2 per batch element, real arithmetic)
            mr00 = uA * r00 - uB * s00 - uC * r10 + uD * s10
            mi00 = uA * s00 + uB * r00 - uC * s10 - uD * r10
            mr01 = uA * r01 - uB * s01 - uC * r11 + uD * s11
            mi01 = uA * s01 + uB * r01 - uC * s11 - uD * r11
            mr10 = uC * r00 + uD * s00 + uA * r10 + uB * s10
            mi10 = uC * s00 - uD * r00 + uA * s10 - uB * r10
            mr11 = uC * r01 + uD * s01 + uA * r11 + uB * s11
            mi11 = uC * s01 - uD * r01 + uA * s11 - uB * r11

            # rho' = M @ U^H
            r00 = uA * mr00 + uB * mi00 - uC * mr01 - uD * mi01
            s00 = uA * mi00 - uB * mr00 - uC * mi01 + uD * mr01
            r01 = uC * mr00 - uD * mi00 + uA * mr01 - uB * mi01
            s01 = uC * mi00 + uD * mr00 + uA * mi01 + uB * mr01
            r10 = uA * mr10 + uB * mi10 - uC * mr11 - uD * mi11
            s10 = uA * mi10 - uB * mr10 - uC * mi11 + uD * mr11
            r11 = uC * mr10 - uD * mi10 + uA * mr11 - uB * mi11
            s11 = uC * mi10 + uD * mr10 + uA * mi11 + uB * mr11

        out_ref[0, sl, :] = r00
        out_ref[1, sl, :] = r01
        out_ref[2, sl, :] = r10
        out_ref[3, sl, :] = r11
        out_ref[4, sl, :] = s00
        out_ref[5, sl, :] = s01
        out_ref[6, sl, :] = s10
        out_ref[7, sl, :] = s11

    # TODO(synk): for very deep circuits (large D3) convert the static gate
    # unroll inside slab_body to a lax.fori_loop carrying the 8 rho tiles.
    if n_slabs == 1:
        slab_body(0)
    else:
        @pl.loop(0, n_slabs)
        def _(si):
            slab_body(si)


def _choose_tiling(B, max_ts):
    n_rows = _cdiv(B, _LANE)
    n_rows_p = _cdiv(n_rows, _SLAB) * _SLAB
    if n_rows_p <= max_ts:
        ts = n_rows_p
        half = n_rows_p // 2
        # Prefer 2 balanced tiles when it costs no padding (v7x megacore).
        if half >= _SLAB and half % _SLAB == 0:
            ts = half
    else:
        n_tiles = _cdiv(n_rows_p, max_ts)
        if n_tiles % 2:                    # even tile count for v7x's 2 TCs
            n_tiles += 1
        ts = _cdiv(_cdiv(n_rows_p, n_tiles), _SLAB) * _SLAB
    n_tiles = _cdiv(n_rows_p, ts)
    return ts, n_tiles, n_tiles * ts


def _qlayer_forward_impl(rho, x, w, theta, max_ts=256):
    """rho: (B, 2, 2) complex64, x: (B, D) float32 -> (B, 2, 2) complex64.

    noise_channels (arbitrary Python callables on rho) are not representable
    inside the kernel; this implements the default forward (noise_channels=[]).
    """
    B, D = x.shape
    D3 = theta.shape[0]
    assert D3 == ((D - 1) // 3 + 1) * 3 and D3 - D <= 2

    ts, n_tiles, n_rows_p = _choose_tiling(B, max_ts)
    Bp = n_rows_p * _LANE

    # pre-halved parameters (kernel forms half-angles directly) + scalar
    # cos/sin(theta/2) for the batch-constant tail gates.
    ht = (0.5 * theta).astype(jnp.float32)
    hw = (0.5 * w).astype(jnp.float32)
    ct = jnp.cos(ht)
    st = jnp.sin(ht)

    # batch-last x, zero-padded in batch only (no D -> D3 padding).
    # TODO(synk): if the caller stores x batch-last / rho planar-packed across
    # layers, these HBM repack passes disappear entirely.
    xT = (jnp.zeros((D, Bp), jnp.float32)
          .at[:, :B].set(x.T.astype(jnp.float32))
          .reshape(D, n_rows_p, _LANE))

    rre = jnp.real(rho).astype(jnp.float32).reshape(B, 4).T   # (4, B)
    rim = jnp.imag(rho).astype(jnp.float32).reshape(B, 4).T   # (4, B)
    rho_pack = (jnp.zeros((8, Bp), jnp.float32)
                .at[:4, :B].set(rre)
                .at[4:, :B].set(rim)
                .reshape(8, n_rows_p, _LANE))

    # advisory cost estimate (pure-VPU / EUP kernel, no MXU role)
    n_groups = D3 // 3
    trans_per_elem = 0
    for g in range(n_groups):
        j1, j2 = 3 * g + 1, 3 * g + 2
        trans_per_elem += 2 + (4 if j2 < D else (2 if j1 < D else 0))
    cost = pl.CostEstimate(
        flops=128 * n_groups * Bp,
        transcendentals=trans_per_elem * Bp,
        bytes_accessed=(D + 16) * Bp * 4,
    )

    out = pl.pallas_call(
        _qlayer_kernel,
        out_shape=jax.ShapeDtypeStruct((8, n_rows_p, _LANE), jnp.float32),
        grid=(n_tiles,),
        in_specs=[
            pl.BlockSpec(memory_space=pltpu.MemorySpace.SMEM),   # half-theta (D3,)
            pl.BlockSpec(memory_space=pltpu.MemorySpace.SMEM),   # half-w (D,)
            pl.BlockSpec(memory_space=pltpu.MemorySpace.SMEM),   # cos(theta/2)
            pl.BlockSpec(memory_space=pltpu.MemorySpace.SMEM),   # sin(theta/2)
            pl.BlockSpec((D, ts, _LANE), lambda i: (0, i, 0)),   # x (batch-last)
            pl.BlockSpec((8, ts, _LANE), lambda i: (0, i, 0)),   # packed rho
        ],
        out_specs=pl.BlockSpec((8, ts, _LANE), lambda i: (0, i, 0)),
        input_output_aliases={5: 0},            # reuse packed-rho buffer for out
        compiler_params=pltpu.CompilerParams(
            dimension_semantics=("parallel",)),
        cost_estimate=cost,
    )(ht, hw, ct, st, xT, rho_pack)

    out = out.reshape(8, Bp)[:, :B]             # (8, B)
    re = out[:4].T.reshape(B, 2, 2)
    im = out[4:].T.reshape(B, 2, 2)
    return (re + 1j * im).astype(jnp.complex64)


qlayer_forward = jax.jit(_qlayer_forward_impl, static_argnames=("max_ts",))


def qlayer_reference(rho, x, w, theta, D, D3):
    """Pure-JAX mirror of the PyTorch forward (for verification)."""
    B = x.shape[0]
    phi = jnp.tile(theta, (B, 1))
    phi = phi.at[:, :D].add(w * x)
    for i in range(D3 // 3):
        c = jnp.cos(phi[:, 3 * i] / 2)
        s = jnp.sin(phi[:, 3 * i] / 2)
        a = (phi[:, 3 * i + 1] + phi[:, 3 * i + 2]) / 2
        b = (phi[:, 3 * i + 1] - phi[:, 3 * i + 2]) / 2
        U = jnp.stack(
            [jnp.stack([c * jnp.exp(1j * a), -s * jnp.exp(1j * b)], axis=-1),
             jnp.stack([s * jnp.exp(-1j * b), c * jnp.exp(-1j * a)], axis=-1)],
            axis=-2)
        rho = jnp.einsum('bim,bmn,bjn->bij', U, rho, jnp.conj(U))
    return rho


if __name__ == "__main__":
    key = jax.random.PRNGKey(0)

    def run_case(case_key, B, D):
        D3 = ((D - 1) // 3 + 1) * 3
        kw, kt, kx, kr1, kr2 = jax.random.split(case_key, 5)
        w = (jax.random.normal(kw, (D,), jnp.float32)
             * np.sqrt(2.0 / 3.0)).astype(jnp.float32)
        theta = (jax.random.normal(kt, (D3,), jnp.float32) * 0.3).astype(jnp.float32)
        x = jax.random.normal(kx, (B, D), jnp.float32)
        rho = (jax.random.normal(kr1, (B, 2, 2), jnp.float32)
               + 1j * jax.random.normal(kr2, (B, 2, 2), jnp.float32)
               ).astype(jnp.complex64)
        out = jax.block_until_ready(qlayer_forward(rho, x, w, theta))
        ref = jax.block_until_ready(qlayer_reference(rho, x, w, theta, D, D3))
        np.testing.assert_allclose(np.asarray(out), np.asarray(ref),
                                   rtol=1e-4, atol=1e-5)

    # D=5 -> one batch-constant tail gate (angle-addition path), single tile
    run_case(jax.random.fold_in(key, 0), B=300, D=5)
    # D=4 -> two batch-constant tail gates (scalar a/b path)
    run_case(jax.random.fold_in(key, 1), B=96, D=4)
    # D=6 -> no tail gates; batch large enough for 2 grid tiles + 2-slab loop
    run_case(jax.random.fold_in(key, 2), B=4096, D=6)

    print("KERNEL_OK")
</pallas_src>

<mosaic_0001>
module attributes {stable_mosaic.version = 11 : i64} {
  func.func @_qlayer_kernel(%arg0: i32, %arg1: memref<6xf32, #tpu.memory_space<smem>>, %arg2: memref<5xf32, #tpu.memory_space<smem>>, %arg3: memref<6xf32, #tpu.memory_space<smem>>, %arg4: memref<6xf32, #tpu.memory_space<smem>>, %arg5: memref<5x8x128xf32, #tpu.memory_space<vmem>>, %arg6: memref<8x8x128xf32, #tpu.memory_space<vmem>>, %arg7: memref<8x8x128xf32, #tpu.memory_space<vmem>>) attributes {dimension_semantics = [#tpu.dimension_semantics<parallel>], iteration_bounds = array<i64: 1>, scalar_prefetch = 0 : i64, scratch_operands = 0 : i64, tpu.core_type = #tpu.core_type<tc>, window_params = [{transform_indices = @transform_0, window_bounds = array<i64: 6>}, {transform_indices = @transform_1, window_bounds = array<i64: 5>}, {transform_indices = @transform_2, window_bounds = array<i64: 6>}, {transform_indices = @transform_3, window_bounds = array<i64: 6>}, {transform_indices = @transform_4, window_bounds = array<i64: 5, 8, 128>}, {transform_indices = @transform_5, window_bounds = array<i64: 8, 8, 128>}, {transform_indices = @transform_6, window_bounds = array<i64: 8, 8, 128>}]} {
    %c0 = arith.constant 0 : index
    %c0_0 = arith.constant 0 : index
    %c0_1 = arith.constant 0 : index
    %0 = vector.load %arg6[%c0, %c0_0, %c0_1] : memref<8x8x128xf32, #tpu.memory_space<vmem>>, vector<1x8x128xf32>
    %1 = vector.shape_cast %0 : vector<1x8x128xf32> to vector<8x128xf32>
    %c1 = arith.constant 1 : index
    %c0_2 = arith.constant 0 : index
    %c0_3 = arith.constant 0 : index
    %2 = vector.load %arg6[%c1, %c0_2, %c0_3] : memref<8x8x128xf32, #tpu.memory_space<vmem>>, vector<1x8x128xf32>
    %3 = vector.shape_cast %2 : vector<1x8x128xf32> to vector<8x128xf32>
    %c2 = arith.constant 2 : index
    %c0_4 = arith.constant 0 : index
    %c0_5 = arith.constant 0 : index
    %4 = vector.load %arg6[%c2, %c0_4, %c0_5] : memref<8x8x128xf32, #tpu.memory_space<vmem>>, vector<1x8x128xf32>
    %5 = vector.shape_cast %4 : vector<1x8x128xf32> to vector<8x128xf32>
    %c3 = arith.constant 3 : index
    %c0_6 = arith.constant 0 : index
    %c0_7 = arith.constant 0 : index
    %6 = vector.load %arg6[%c3, %c0_6, %c0_7] : memref<8x8x128xf32, #tpu.memory_space<vmem>>, vector<1x8x128xf32>
    %7 = vector.shape_cast %6 : vector<1x8x128xf32> to vector<8x128xf32>
    %c4 = arith.constant 4 : index
    %c0_8 = arith.constant 0 : index
    %c0_9 = arith.constant 0 : index
    %8 = vector.load %arg6[%c4, %c0_8, %c0_9] : memref<8x8x128xf32, #tpu.memory_space<vmem>>, vector<1x8x128xf32>
    %9 = vector.shape_cast %8 : vector<1x8x128xf32> to vector<8x128xf32>
    %c5 = arith.constant 5 : index
    %c0_10 = arith.constant 0 : index
    %c0_11 = arith.constant 0 : index
    %10 = vector.load %arg6[%c5, %c0_10, %c0_11] : memref<8x8x128xf32, #tpu.memory_space<vmem>>, vector<1x8x128xf32>
    %11 = vector.shape_cast %10 : vector<1x8x128xf32> to vector<8x128xf32>
    %c6 = arith.constant 6 : index
    %c0_12 = arith.constant 0 : index
    %c0_13 = arith.constant 0 : index
    %12 = vector.load %arg6[%c6, %c0_12, %c0_13] : memref<8x8x128xf32, #tpu.memory_space<vmem>>, vector<1x8x128xf32>
    %13 = vector.shape_cast %12 : vector<1x8x128xf32> to vector<8x128xf32>
    %c7 = arith.constant 7 : index
    %c0_14 = arith.constant 0 : index
    %c0_15 = arith.constant 0 : index
    %14 = vector.load %arg6[%c7, %c0_14, %c0_15] : memref<8x8x128xf32, #tpu.memory_space<vmem>>, vector<1x8x128xf32>
    %15 = vector.shape_cast %14 : vector<1x8x128xf32> to vector<8x128xf32>
    %c0_16 = arith.constant 0 : index
    %16 = memref.load %arg1[%c0_16] : memref<6xf32, #tpu.memory_space<smem>>
    %c0_17 = arith.constant 0 : index
    %17 = memref.load %arg2[%c0_17] : memref<5xf32, #tpu.memory_space<smem>>
    %c0_18 = arith.constant 0 : index
    %c0_19 = arith.constant 0 : index
    %c0_20 = arith.constant 0 : index
    %18 = vector.load %arg5[%c0_18, %c0_19, %c0_20] : memref<5x8x128xf32, #tpu.memory_space<vmem>>, vector<1x8x128xf32>
    %19 = vector.shape_cast %18 : vector<1x8x128xf32> to vector<8x128xf32>
    %20 = vector.broadcast %17 : f32 to vector<8x128xf32>
    %21 = arith.mulf %20, %19 : vector<8x128xf32>
    %22 = vector.broadcast %16 : f32 to vector<8x128xf32>
    %23 = arith.addf %22, %21 : vector<8x128xf32>
    %24 = math.cos %23 : vector<8x128xf32>
    %25 = math.sin %23 : vector<8x128xf32>
    %c1_21 = arith.constant 1 : index
    %26 = memref.load %arg1[%c1_21] : memref<6xf32, #tpu.memory_space<smem>>
    %c1_22 = arith.constant 1 : index
    %27 = memref.load %arg2[%c1_22] : memref<5xf32, #tpu.memory_space<smem>>
    %c1_23 = arith.constant 1 : index
    %c0_24 = arith.constant 0 : index
    %c0_25 = arith.constant 0 : index
    %28 = vector.load %arg5[%c1_23, %c0_24, %c0_25] : memref<5x8x128xf32, #tpu.memory_space<vmem>>, vector<1x8x128xf32>
    %29 = vector.shape_cast %28 : vector<1x8x128xf32> to vector<8x128xf32>
    %30 = vector.broadcast %27 : f32 to vector<8x128xf32>
    %31 = arith.mulf %30, %29 : vector<8x128xf32>
    %32 = vector.broadcast %26 : f32 to vector<8x128xf32>
    %33 = arith.addf %32, %31 : vector<8x128xf32>
    %c2_26 = arith.constant 2 : index
    %34 = memref.load %arg1[%c2_26] : memref<6xf32, #tpu.memory_space<smem>>
    %c2_27 = arith.constant 2 : index
    %35 = memref.load %arg2[%c2_27] : memref<5xf32, #tpu.memory_space<smem>>
    %c2_28 = arith.constant 2 : index
    %c0_29 = arith.constant 0 : index
    %c0_30 = arith.constant 0 : index
    %36 = vector.load %arg5[%c2_28, %c0_29, %c0_30] : memref<5x8x128xf32, #tpu.memory_space<vmem>>, vector<1x8x128xf32>
    %37 = vector.shape_cast %36 : vector<1x8x128xf32> to vector<8x128xf32>
    %38 = vector.broadcast %35 : f32 to vector<8x128xf32>
    %39 = arith.mulf %38, %37 : vector<8x128xf32>
    %40 = vector.broadcast %34 : f32 to vector<8x128xf32>
    %41 = arith.addf %40, %39 : vector<8x128xf32>
    %42 = arith.addf %33, %41 : vector<8x128xf32>
    %43 = arith.subf %33, %41 : vector<8x128xf32>
    %44 = math.cos %42 : vector<8x128xf32>
    %45 = math.sin %42 : vector<8x128xf32>
    %46 = math.cos %43 : vector<8x128xf32>
    %47 = math.sin %43 : vector<8x128xf32>
    %48 = arith.mulf %24, %44 : vector<8x128xf32>
    %49 = arith.mulf %24, %45 : vector<8x128xf32>
    %50 = arith.mulf %25, %46 : vector<8x128xf32>
    %51 = arith.mulf %25, %47 : vector<8x128xf32>
    %52 = arith.mulf %48, %1 : vector<8x128xf32>
    %53 = arith.mulf %49, %9 : vector<8x128xf32>
    %54 = arith.subf %52, %53 : vector<8x128xf32>
    %55 = arith.mulf %50, %5 : vector<8x128xf32>
    %56 = arith.subf %54, %55 : vector<8x128xf32>
    %57 = arith.mulf %51, %13 : vector<8x128xf32>
    %58 = arith.addf %56, %57 : vector<8x128xf32>
    %59 = arith.mulf %48, %9 : vector<8x128xf32>
    %60 = arith.mulf %49, %1 : vector<8x128xf32>
    %61 = arith.addf %59, %60 : vector<8x128xf32>
    %62 = arith.mulf %50, %13 : vector<8x128xf32>
    %63 = arith.subf %61, %62 : vector<8x128xf32>
    %64 = arith.mulf %51, %5 : vector<8x128xf32>
    %65 = arith.subf %63, %64 : vector<8x128xf32>
    %66 = arith.mulf %48, %3 : vector<8x128xf32>
    %67 = arith.mulf %49, %11 : vector<8x128xf32>
    %68 = arith.subf %66, %67 : vector<8x128xf32>
    %69 = arith.mulf %50, %7 : vector<8x128xf32>
    %70 = arith.subf %68, %69 : vector<8x128xf32>
    %71 = arith.mulf %51, %15 : vector<8x128xf32>
    %72 = arith.addf %70, %71 : vector<8x128xf32>
    %73 = arith.mulf %48, %11 : vector<8x128xf32>
    %74 = arith.mulf %49, %3 : vector<8x128xf32>
    %75 = arith.addf %73, %74 : vector<8x128xf32>
    %76 = arith.mulf %50, %15 : vector<8x128xf32>
    %77 = arith.subf %75, %76 : vector<8x128xf32>
    %78 = arith.mulf %51, %7 : vector<8x128xf32>
    %79 = arith.subf %77, %78 : vector<8x128xf32>
    %80 = arith.mulf %50, %1 : vector<8x128xf32>
    %81 = arith.mulf %51, %9 : vector<8x128xf32>
    %82 = arith.addf %80, %81 : vector<8x128xf32>
    %83 = arith.mulf %48, %5 : vector<8x128xf32>
    %84 = arith.addf %82, %83 : vector<8x128xf32>
    %85 = arith.mulf %49, %13 : vector<8x128xf32>
    %86 = arith.addf %84, %85 : vector<8x128xf32>
    %87 = arith.mulf %50, %9 : vector<8x128xf32>
    %88 = arith.mulf %51, %1 : vector<8x128xf32>
    %89 = arith.subf %87, %88 : vector<8x128xf32>
    %90 = arith.mulf %48, %13 : vector<8x128xf32>
    %91 = arith.addf %89, %90 : vector<8x128xf32>
    %92 = arith.mulf %49, %5 : vector<8x128xf32>
    %93 = arith.subf %91, %92 : vector<8x128xf32>
    %94 = arith.mulf %50, %3 : vector<8x128xf32>
    %95 = arith.mulf %51, %11 : vector<8x128xf32>
    %96 = arith.addf %94, %95 : vector<8x128xf32>
    %97 = arith.mulf %48, %7 : vector<8x128xf32>
    %98 = arith.addf %96, %97 : vector<8x128xf32>
    %99 = arith.mulf %49, %15 : vector<8x128xf32>
    %100 = arith.addf %98, %99 : vector<8x128xf32>
    %101 = arith.mulf %50, %11 : vector<8x128xf32>
    %102 = arith.mulf %51, %3 : vector<8x128xf32>
    %103 = arith.subf %101, %102 : vector<8x128xf32>
    %104 = arith.mulf %48, %15 : vector<8x128xf32>
    %105 = arith.addf %103, %104 : vector<8x128xf32>
    %106 = arith.mulf %49, %7 : vector<8x128xf32>
    %107 = arith.subf %105, %106 : vector<8x128xf32>
    %108 = arith.mulf %48, %58 : vector<8x128xf32>
    %109 = arith.mulf %49, %65 : vector<8x128xf32>
    %110 = arith.addf %108, %109 : vector<8x128xf32>
    %111 = arith.mulf %50, %72 : vector<8x128xf32>
    %112 = arith.subf %110, %111 : vector<8x128xf32>
    %113 = arith.mulf %51, %79 : vector<8x128xf32>
    %114 = arith.subf %112, %113 : vector<8x128xf32>
    %115 = arith.mulf %48, %65 : vector<8x128xf32>
    %116 = arith.mulf %49, %58 : vector<8x128xf32>
    %117 = arith.subf %115, %116 : vector<8x128xf32>
    %118 = arith.mulf %50, %79 : vector<8x128xf32>
    %119 = arith.subf %117, %118 : vector<8x128xf32>
    %120 = arith.mulf %51, %72 : vector<8x128xf32>
    %121 = arith.addf %119, %120 : vector<8x128xf32>
    %122 = arith.mulf %50, %58 : vector<8x128xf32>
    %123 = arith.mulf %51, %65 : vector<8x128xf32>
    %124 = arith.subf %122, %123 : vector<8x128xf32>
    %125 = arith.mulf %48, %72 : vector<8x128xf32>
    %126 = arith.addf %124, %125 : vector<8x128xf32>
    %127 = arith.mulf %49, %79 : vector<8x128xf32>
    %128 = arith.subf %126, %127 : vector<8x128xf32>
    %129 = arith.mulf %50, %65 : vector<8x128xf32>
    %130 = arith.mulf %51, %58 : vector<8x128xf32>
    %131 = arith.addf %129, %130 : vector<8x128xf32>
    %132 = arith.mulf %48, %79 : vector<8x128xf32>
    %133 = arith.addf %131, %132 : vector<8x128xf32>
    %134 = arith.mulf %49, %72 : vector<8x128xf32>
    %135 = arith.addf %133, %134 : vector<8x128xf32>
    %136 = arith.mulf %48, %86 : vector<8x128xf32>
    %137 = arith.mulf %49, %93 : vector<8x128xf32>
    %138 = arith.addf %136, %137 : vector<8x128xf32>
    %139 = arith.mulf %50, %100 : vector<8x128xf32>
    %140 = arith.subf %138, %139 : vector<8x128xf32>
    %141 = arith.mulf %51, %107 : vector<8x128xf32>
    %142 = arith.subf %140, %141 : vector<8x128xf32>
    %143 = arith.mulf %48, %93 : vector<8x128xf32>
    %144 = arith.mulf %49, %86 : vector<8x128xf32>
    %145 = arith.subf %143, %144 : vector<8x128xf32>
    %146 = arith.mulf %50, %107 : vector<8x128xf32>
    %147 = arith.subf %145, %146 : vector<8x128xf32>
    %148 = arith.mulf %51, %100 : vector<8x128xf32>
    %149 = arith.addf %147, %148 : vector<8x128xf32>
    %150 = arith.mulf %50, %86 : vector<8x128xf32>
    %151 = arith.mulf %51, %93 : vector<8x128xf32>
    %152 = arith.subf %150, %151 : vector<8x128xf32>
    %153 = arith.mulf %48, %100 : vector<8x128xf32>
    %154 = arith.addf %152, %153 : vector<8x128xf32>
    %155 = arith.mulf %49, %107 : vector<8x128xf32>
    %156 = arith.subf %154, %155 : vector<8x128xf32>
    %157 = arith.mulf %50, %93 : vector<8x128xf32>
    %158 = arith.mulf %51, %86 : vector<8x128xf32>
    %159 = arith.addf %157, %158 : vector<8x128xf32>
    %160 = arith.mulf %48, %107 : vector<8x128xf32>
    %161 = arith.addf %159, %160 : vector<8x128xf32>
    %162 = arith.mulf %49, %100 : vector<8x128xf32>
    %163 = arith.addf %161, %162 : vector<8x128xf32>
    %c3_31 = arith.constant 3 : index
    %164 = memref.load %arg1[%c3_31] : memref<6xf32, #tpu.memory_space<smem>>
    %c3_32 = arith.constant 3 : index
    %165 = memref.load %arg2[%c3_32] : memref<5xf32, #tpu.memory_space<smem>>
    %c3_33 = arith.constant 3 : index
    %c0_34 = arith.constant 0 : index
    %c0_35 = arith.constant 0 : index
    %166 = vector.load %arg5[%c3_33, %c0_34, %c0_35] : memref<5x8x128xf32, #tpu.memory_space<vmem>>, vector<1x8x128xf32>
    %167 = vector.shape_cast %166 : vector<1x8x128xf32> to vector<8x128xf32>
    %168 = vector.broadcast %165 : f32 to vector<8x128xf32>
    %169 = arith.mulf %168, %167 : vector<8x128xf32>
    %170 = vector.broadcast %164 : f32 to vector<8x128xf32>
    %171 = arith.addf %170, %169 : vector<8x128xf32>
    %172 = math.cos %171 : vector<8x128xf32>
    %173 = math.sin %171 : vector<8x128xf32>
    %c4_36 = arith.constant 4 : index
    %174 = memref.load %arg1[%c4_36] : memref<6xf32, #tpu.memory_space<smem>>
    %c4_37 = arith.constant 4 : index
    %175 = memref.load %arg2[%c4_37] : memref<5xf32, #tpu.memory_space<smem>>
    %c4_38 = arith.constant 4 : index
    %c0_39 = arith.constant 0 : index
    %c0_40 = arith.constant 0 : index
    %176 = vector.load %arg5[%c4_38, %c0_39, %c0_40] : memref<5x8x128xf32, #tpu.memory_space<vmem>>, vector<1x8x128xf32>
    %177 = vector.shape_cast %176 : vector<1x8x128xf32> to vector<8x128xf32>
    %178 = vector.broadcast %175 : f32 to vector<8x128xf32>
    %179 = arith.mulf %178, %177 : vector<8x128xf32>
    %180 = vector.broadcast %174 : f32 to vector<8x128xf32>
    %181 = arith.addf %180, %179 : vector<8x128xf32>
    %182 = math.cos %181 : vector<8x128xf32>
    %183 = math.sin %181 : vector<8x128xf32>
    %c5_41 = arith.constant 5 : index
    %184 = memref.load %arg3[%c5_41] : memref<6xf32, #tpu.memory_space<smem>>
    %c5_42 = arith.constant 5 : index
    %185 = memref.load %arg4[%c5_42] : memref<6xf32, #tpu.memory_space<smem>>
    %186 = vector.broadcast %184 : f32 to vector<8x128xf32>
    %187 = arith.mulf %182, %186 : vector<8x128xf32>
    %188 = vector.broadcast %185 : f32 to vector<8x128xf32>
    %189 = arith.mulf %183, %188 : vector<8x128xf32>
    %190 = arith.subf %187, %189 : vector<8x128xf32>
    %191 = vector.broadcast %184 : f32 to vector<8x128xf32>
    %192 = arith.mulf %183, %191 : vector<8x128xf32>
    %193 = vector.broadcast %185 : f32 to vector<8x128xf32>
    %194 = arith.mulf %182, %193 : vector<8x128xf32>
    %195 = arith.addf %192, %194 : vector<8x128xf32>
    %196 = vector.broadcast %184 : f32 to vector<8x128xf32>
    %197 = arith.mulf %182, %196 : vector<8x128xf32>
    %198 = vector.broadcast %185 : f32 to vector<8x128xf32>
    %199 = arith.mulf %183, %198 : vector<8x128xf32>
    %200 = arith.addf %197, %199 : vector<8x128xf32>
    %201 = vector.broadcast %184 : f32 to vector<8x128xf32>
    %202 = arith.mulf %183, %201 : vector<8x128xf32>
    %203 = vector.broadcast %185 : f32 to vector<8x128xf32>
    %204 = arith.mulf %182, %203 : vector<8x128xf32>
    %205 = arith.subf %202, %204 : vector<8x128xf32>
    %206 = arith.mulf %172, %190 : vector<8x128xf32>
    %207 = arith.mulf %172, %195 : vector<8x128xf32>
    %208 = arith.mulf %173, %200 : vector<8x128xf32>
    %209 = arith.mulf %173, %205 : vector<8x128xf32>
    %210 = arith.mulf %206, %114 : vector<8x128xf32>
    %211 = arith.mulf %207, %121 : vector<8x128xf32>
    %212 = arith.subf %210, %211 : vector<8x128xf32>
    %213 = arith.mulf %208, %142 : vector<8x128xf32>
    %214 = arith.subf %212, %213 : vector<8x128xf32>
    %215 = arith.mulf %209, %149 : vector<8x128xf32>
    %216 = arith.addf %214, %215 : vector<8x128xf32>
    %217 = arith.mulf %206, %121 : vector<8x128xf32>
    %218 = arith.mulf %207, %114 : vector<8x128xf32>
    %219 = arith.addf %217, %218 : vector<8x128xf32>
    %220 = arith.mulf %208, %149 : vector<8x128xf32>
    %221 = arith.subf %219, %220 : vector<8x128xf32>
    %222 = arith.mulf %209, %142 : vector<8x128xf32>
    %223 = arith.subf %221, %222 : vector<8x128xf32>
    %224 = arith.mulf %206, %128 : vector<8x128xf32>
    %225 = arith.mulf %207, %135 : vector<8x128xf32>
    %226 = arith.subf %224, %225 : vector<8x128xf32>
    %227 = arith.mulf %208, %156 : vector<8x128xf32>
    %228 = arith.subf %226, %227 : vector<8x128xf32>
    %229 = arith.mulf %209, %163 : vector<8x128xf32>
    %230 = arith.addf %228, %229 : vector<8x128xf32>
    %231 = arith.mulf %206, %135 : vector<8x128xf32>
    %232 = arith.mulf %207, %128 : vector<8x128xf32>
    %233 = arith.addf %231, %232 : vector<8x128xf32>
    %234 = arith.mulf %208, %163 : vector<8x128xf32>
    %235 = arith.subf %233, %234 : vector<8x128xf32>
    %236 = arith.mulf %209, %156 : vector<8x128xf32>
    %237 = arith.subf %235, %236 : vector<8x128xf32>
    %238 = arith.mulf %208, %114 : vector<8x128xf32>
    %239 = arith.mulf %209, %121 : vector<8x128xf32>
    %240 = arith.addf %238, %239 : vector<8x128xf32>
    %241 = arith.mulf %206, %142 : vector<8x128xf32>
    %242 = arith.addf %240, %241 : vector<8x128xf32>
    %243 = arith.mulf %207, %149 : vector<8x128xf32>
    %244 = arith.addf %242, %243 : vector<8x128xf32>
    %245 = arith.mulf %208, %121 : vector<8x128xf32>
    %246 = arith.mulf %209, %114 : vector<8x128xf32>
    %247 = arith.subf %245, %246 : vector<8x128xf32>
    %248 = arith.mulf %206, %149 : vector<8x128xf32>
    %249 = arith.addf %247, %248 : vector<8x128xf32>
    %250 = arith.mulf %207, %142 : vector<8x128xf32>
    %251 = arith.subf %249, %250 : vector<8x128xf32>
    %252 = arith.mulf %208, %128 : vector<8x128xf32>
    %253 = arith.mulf %209, %135 : vector<8x128xf32>
    %254 = arith.addf %252, %253 : vector<8x128xf32>
    %255 = arith.mulf %206, %156 : vector<8x128xf32>
    %256 = arith.addf %254, %255 : vector<8x128xf32>
    %257 = arith.mulf %207, %163 : vector<8x128xf32>
    %258 = arith.addf %256, %257 : vector<8x128xf32>
    %259 = arith.mulf %208, %135 : vector<8x128xf32>
    %260 = arith.mulf %209, %128 : vector<8x128xf32>
    %261 = arith.subf %259, %260 : vector<8x128xf32>
    %262 = arith.mulf %206, %163 : vector<8x128xf32>
    %263 = arith.addf %261, %262 : vector<8x128xf32>
    %264 = arith.mulf %207, %156 : vector<8x128xf32>
    %265 = arith.subf %263, %264 : vector<8x128xf32>
    %266 = arith.mulf %206, %216 : vector<8x128xf32>
    %267 = arith.mulf %207, %223 : vector<8x128xf32>
    %268 = arith.addf %266, %267 : vector<8x128xf32>
    %269 = arith.mulf %208, %230 : vector<8x128xf32>
    %270 = arith.subf %268, %269 : vector<8x128xf32>
    %271 = arith.mulf %209, %237 : vector<8x128xf32>
    %272 = arith.subf %270, %271 : vector<8x128xf32>
    %273 = arith.mulf %206, %223 : vector<8x128xf32>
    %274 = arith.mulf %207, %216 : vector<8x128xf32>
    %275 = arith.subf %273, %274 : vector<8x128xf32>
    %276 = arith.mulf %208, %237 : vector<8x128xf32>
    %277 = arith.subf %275, %276 : vector<8x128xf32>
    %278 = arith.mulf %209, %230 : vector<8x128xf32>
    %279 = arith.addf %277, %278 : vector<8x128xf32>
    %280 = arith.mulf %208, %216 : vector<8x128xf32>
    %281 = arith.mulf %209, %223 : vector<8x128xf32>
    %282 = arith.subf %280, %281 : vector<8x128xf32>
    %283 = arith.mulf %206, %230 : vector<8x128xf32>
    %284 = arith.addf %282, %283 : vector<8x128xf32>
    %285 = arith.mulf %207, %237 : vector<8x128xf32>
    %286 = arith.subf %284, %285 : vector<8x128xf32>
    %287 = arith.mulf %208, %223 : vector<8x128xf32>
    %288 = arith.mulf %209, %216 : vector<8x128xf32>
    %289 = arith.addf %287, %288 : vector<8x128xf32>
    %290 = arith.mulf %206, %237 : vector<8x128xf32>
    %291 = arith.addf %289, %290 : vector<8x128xf32>
    %292 = arith.mulf %207, %230 : vector<8x128xf32>
    %293 = arith.addf %291, %292 : vector<8x128xf32>
    %294 = arith.mulf %206, %244 : vector<8x128xf32>
    %295 = arith.mulf %207, %251 : vector<8x128xf32>
    %296 = arith.addf %294, %295 : vector<8x128xf32>
    %297 = arith.mulf %208, %258 : vector<8x128xf32>
    %298 = arith.subf %296, %297 : vector<8x128xf32>
    %299 = arith.mulf %209, %265 : vector<8x128xf32>
    %300 = arith.subf %298, %299 : vector<8x128xf32>
    %301 = arith.mulf %206, %251 : vector<8x128xf32>
    %302 = arith.mulf %207, %244 : vector<8x128xf32>
    %303 = arith.subf %301, %302 : vector<8x128xf32>
    %304 = arith.mulf %208, %265 : vector<8x128xf32>
    %305 = arith.subf %303, %304 : vector<8x128xf32>
    %306 = arith.mulf %209, %258 : vector<8x128xf32>
    %307 = arith.addf %305, %306 : vector<8x128xf32>
    %308 = arith.mulf %208, %244 : vector<8x128xf32>
    %309 = arith.mulf %209, %251 : vector<8x128xf32>
    %310 = arith.subf %308, %309 : vector<8x128xf32>
    %311 = arith.mulf %206, %258 : vector<8x128xf32>
    %312 = arith.addf %310, %311 : vector<8x128xf32>
    %313 = arith.mulf %207, %265 : vector<8x128xf32>
    %314 = arith.subf %312, %313 : vector<8x128xf32>
    %315 = arith.mulf %208, %251 : vector<8x128xf32>
    %316 = arith.mulf %209, %244 : vector<8x128xf32>
    %317 = arith.addf %315, %316 : vector<8x128xf32>
    %318 = arith.mulf %206, %265 : vector<8x128xf32>
    %319 = arith.addf %317, %318 : vector<8x128xf32>
    %320 = arith.mulf %207, %258 : vector<8x128xf32>
    %321 = arith.addf %319, %320 : vector<8x128xf32>
    %c0_43 = arith.constant 0 : index
    %c0_44 = arith.constant 0 : index
    %c0_45 = arith.constant 0 : index
    %322 = vector.load %arg7[%c0_43, %c0_44, %c0_45] : memref<8x8x128xf32, #tpu.memory_space<vmem>>, vector<1x8x128xf32>
    %323 = vector.shape_cast %322 : vector<1x8x128xf32> to vector<8x128xf32>
    %324 = vector.shape_cast %272 : vector<8x128xf32> to vector<1x8x128xf32>
    tpu.vector_store %arg7[%c0_43, %c0_44, %c0_45], %324 {strides = array<i32>} : memref<8x8x128xf32, #tpu.memory_space<vmem>>, vector<1x8x128xf32>,
    %c1_46 = arith.constant 1 : index
    %c0_47 = arith.constant 0 : index
    %c0_48 = arith.constant 0 : index
    %325 = vector.load %arg7[%c1_46, %c0_47, %c0_48] : memref<8x8x128xf32, #tpu.memory_space<vmem>>, vector<1x8x128xf32>
    %326 = vector.shape_cast %325 : vector<1x8x128xf32> to vector<8x128xf32>
    %327 = vector.shape_cast %286 : vector<8x128xf32> to vector<1x8x128xf32>
    tpu.vector_store %arg7[%c1_46, %c0_47, %c0_48], %327 {strides = array<i32>} : memref<8x8x128xf32, #tpu.memory_space<vmem>>, vector<1x8x128xf32>,
    %c2_49 = arith.constant 2 : index
    %c0_50 = arith.constant 0 : index
    %c0_51 = arith.constant 0 : index
    %328 = vector.load %arg7[%c2_49, %c0_50, %c0_51] : memref<8x8x128xf32, #tpu.memory_space<vmem>>, vector<1x8x128xf32>
    %329 = vector.shape_cast %328 : vector<1x8x128xf32> to vector<8x128xf32>
    %330 = vector.shape_cast %300 : vector<8x128xf32> to vector<1x8x128xf32>
    tpu.vector_store %arg7[%c2_49, %c0_50, %c0_51], %330 {strides = array<i32>} : memref<8x8x128xf32, #tpu.memory_space<vmem>>, vector<1x8x128xf32>,
    %c3_52 = arith.constant 3 : index
    %c0_53 = arith.constant 0 : index
    %c0_54 = arith.constant 0 : index
    %331 = vector.load %arg7[%c3_52, %c0_53, %c0_54] : memref<8x8x128xf32, #tpu.memory_space<vmem>>, vector<1x8x128xf32>
    %332 = vector.shape_cast %331 : vector<1x8x128xf32> to vector<8x128xf32>
    %333 = vector.shape_cast %314 : vector<8x128xf32> to vector<1x8x128xf32>
    tpu.vector_store %arg7[%c3_52, %c0_53, %c0_54], %333 {strides = array<i32>} : memref<8x8x128xf32, #tpu.memory_space<vmem>>, vector<1x8x128xf32>,
    %c4_55 = arith.constant 4 : index
    %c0_56 = arith.constant 0 : index
    %c0_57 = arith.constant 0 : index
    %334 = vector.load %arg7[%c4_55, %c0_56, %c0_57] : memref<8x8x128xf32, #tpu.memory_space<vmem>>, vector<1x8x128xf32>
    %335 = vector.shape_cast %334 : vector<1x8x128xf32> to vector<8x128xf32>
    %336 = vector.shape_cast %279 : vector<8x128xf32> to vector<1x8x128xf32>
    tpu.vector_store %arg7[%c4_55, %c0_56, %c0_57], %336 {strides = array<i32>} : memref<8x8x128xf32, #tpu.memory_space<vmem>>, vector<1x8x128xf32>,
    %c5_58 = arith.constant 5 : index
    %c0_59 = arith.constant 0 : index
    %c0_60 = arith.constant 0 : index
    %337 = vector.load %arg7[%c5_58, %c0_59, %c0_60] : memref<8x8x128xf32, #tpu.memory_space<vmem>>, vector<1x8x128xf32>
    %338 = vector.shape_cast %337 : vector<1x8x128xf32> to vector<8x128xf32>
    %339 = vector.shape_cast %293 : vector<8x128xf32> to vector<1x8x128xf32>
    tpu.vector_store %arg7[%c5_58, %c0_59, %c0_60], %339 {strides = array<i32>} : memref<8x8x128xf32, #tpu.memory_space<vmem>>, vector<1x8x128xf32>,
    %c6_61 = arith.constant 6 : index
    %c0_62 = arith.constant 0 : index
    %c0_63 = arith.constant 0 : index
    %340 = vector.load %arg7[%c6_61, %c0_62, %c0_63] : memref<8x8x128xf32, #tpu.memory_space<vmem>>, vector<1x8x128xf32>
    %341 = vector.shape_cast %340 : vector<1x8x128xf32> to vector<8x128xf32>
    %342 = vector.shape_cast %307 : vector<8x128xf32> to vector<1x8x128xf32>
    tpu.vector_store %arg7[%c6_61, %c0_62, %c0_63], %342 {strides = array<i32>} : memref<8x8x128xf32, #tpu.memory_space<vmem>>, vector<1x8x128xf32>,
    %c7_64 = arith.constant 7 : index
    %c0_65 = arith.constant 0 : index
    %c0_66 = arith.constant 0 : index
    %343 = vector.load %arg7[%c7_64, %c0_65, %c0_66] : memref<8x8x128xf32, #tpu.memory_space<vmem>>, vector<1x8x128xf32>
    %344 = vector.shape_cast %343 : vector<1x8x128xf32> to vector<8x128xf32>
    %345 = vector.shape_cast %321 : vector<8x128xf32> to vector<1x8x128xf32>
    tpu.vector_store %arg7[%c7_64, %c0_65, %c0_66], %345 {strides = array<i32>} : memref<8x8x128xf32, #tpu.memory_space<vmem>>, vector<1x8x128xf32>,
    return
  }
  func.func @transform_0(%arg0: i32) -> i32 {
    %c0_i32 = arith.constant 0 : i32
    %c0_i32_0 = arith.constant 0 : i32
    return %c0_i32 : i32
  }
  func.func @transform_1(%arg0: i32) -> i32 {
    %c0_i32 = arith.constant 0 : i32
    %c0_i32_0 = arith.constant 0 : i32
    return %c0_i32 : i32
  }
  func.func @transform_2(%arg0: i32) -> i32 {
    %c0_i32 = arith.constant 0 : i32
    %c0_i32_0 = arith.constant 0 : i32
    return %c0_i32 : i32
  }
  func.func @transform_3(%arg0: i32) -> i32 {
    %c0_i32 = arith.constant 0 : i32
    %c0_i32_0 = arith.constant 0 : i32
    return %c0_i32 : i32
  }
  func.func @transform_4(%arg0: i32) -> (i32, i32, i32) {
    %c0_i32 = arith.constant 0 : i32
    %c0_i32_0 = arith.constant 0 : i32
    %c0_i32_1 = arith.constant 0 : i32
    return %c0_i32, %arg0, %c0_i32_0 : i32, i32, i32
  }
  func.func @transform_5(%arg0: i32) -> (i32, i32, i32) {
    %c0_i32 = arith.constant 0 : i32
    %c0_i32_0 = arith.constant 0 : i32
    %c0_i32_1 = arith.constant 0 : i32
    return %c0_i32, %arg0, %c0_i32_0 : i32, i32, i32
  }
  func.func @transform_6(%arg0: i32) -> (i32, i32, i32) {
    %c0_i32 = arith.constant 0 : i32
    %c0_i32_0 = arith.constant 0 : i32
    %c0_i32_1 = arith.constant 0 : i32
    return %c0_i32, %arg0, %c0_i32_0 : i32, i32, i32
  }
}

</mosaic_0001>

<llo_original>
// kernel: custom-call
$region0: #{custom-call}
  %s0 = inlined_call_operand.hbm [shape: c64[300,2,2], index: 0, kind: input, shape index: {}]
  %s1 = inlined_call_operand.vmem [shape: f32[300,2,2], index: 1, kind: output, shape index: {}]
  $region1: #{custom-call} parent=0
    #allocation0 [shape = 's32[1]{0}', space=sflag, size = 0x4, scoped, tag = 'scoped memory for custom-call']
    %2 = vsyncpa [#allocation0], 0
    %s3 = sshll.u32 %s1, 4
    %s4 = int_to_ptr.vmem [resolvable:$true] %s3
    %6 = dma.hbm_to_vmem [thread:$0]  %s0, 192, %s4, [#allocation0]
    %7 = dma.done [#allocation0], 192
    %8 = vsyncpa [#allocation0], 1

// kernel: custom-call.1
$region0: #{custom-call.1}
  %s0 = inlined_call_operand.hbm [shape: c64[300,2,2], index: 0, kind: input, shape index: {}]
  %s1 = inlined_call_operand.vmem [shape: f32[300,2,2], index: 1, kind: output, shape index: {}]
  %s2 = scalar_lea.hbm %s0, 192
  $region1: #{custom-call.1} parent=0
    #allocation0 [shape = 's32[1]{0}', space=sflag, size = 0x4, scoped, tag = 'scoped memory for custom-call.1']
    %3 = vsyncpa [#allocation0], 0
    %s4 = sshll.u32 %s1, 4
    %s5 = int_to_ptr.vmem [resolvable:$true] %s4
    %7 = dma.hbm_to_vmem [thread:$0]  %s2, 192, %s5, [#allocation0]
    %8 = dma.done [#allocation0], 192
    %9 = vsyncpa [#allocation0], 1

// kernel: custom-call.2
$region0: #{custom-call.2}
  %s0 = inlined_call_operand.vmem [shape: f32[300,2,2], index: 0, kind: input, shape index: {}]
  %s1 = inlined_call_operand.vmem [shape: f32[300,2,2], index: 1, kind: input, shape index: {}]
  %s2 = inlined_call_operand.hbm [shape: c64[300,2,2], index: 2, kind: output, shape index: {}]
  %s3 = scalar_lea.hbm %s2, 192
  $region1: #{custom-call.2} parent=0
    #allocation0 [shape = 's32[1]{0}', space=sflag, size = 0x4, scoped, tag = 'scoped memory for custom-call.2']
    %4 = vsyncpa [#allocation0], 0
    %s5 = sshll.u32 %s0, 4
    %s6 = int_to_ptr.vmem [resolvable:$true] %s5
    %8 = dma.vmem_to_hbm [thread:$0]  %s6, 192, %s2, [#allocation0]
    %9 = dma.done [#allocation0], 192
    %10 = vsyncpa [#allocation0], 1
  $region2: #{custom-call.2} parent=0
    #allocation1 [shape = 's32[1]{0}', space=sflag, size = 0x4, scoped, tag = 'scoped memory for custom-call.2']
    %11 = vsyncpa [#allocation1], 0
    %s12 = sshll.u32 %s1, 4
    %s13 = int_to_ptr.vmem [resolvable:$true] %s12
    %15 = dma.vmem_to_hbm [thread:$0]  %s13, 192, %s3, [#allocation1]
    %16 = dma.done [#allocation1], 192
    %17 = vsyncpa [#allocation1], 1

// kernel: _qlayer_forward_impl.1
$region0: #{_qlayer_forward_impl.1}
  #allocation0 [shape = 'u32[]', space=smem, size = 0x4, offset = 0x4, fixed_abs, tag = 'smem constant byte address 0x4 - core index']
  #allocation1 [shape = 'u32[144,128]{1,0:T(1,128)}', space=vmem, size = 0x12000, scoped, tag = 'internal scratch']
  %s0 = inlined_call_operand.vmem [shape: f32[6], index: 0, kind: input, shape index: {}]
  %s1 = inlined_call_operand.vmem [shape: f32[5], index: 1, kind: input, shape index: {}]
  %s2 = inlined_call_operand.vmem [shape: f32[6], index: 2, kind: input, shape index: {}]
  %s3 = inlined_call_operand.vmem [shape: f32[6], index: 3, kind: input, shape index: {}]
  %s4 = inlined_call_operand.vmem [shape: f32[5,8,128], index: 4, kind: input, shape index: {}]
  %s5 = inlined_call_operand.vmem [shape: f32[8,8,128], index: 5, kind: input, shape index: {}, may-alias: {5,6}]
  %s6 = inlined_call_operand.vmem [shape: f32[8,8,128], index: 6, kind: output, shape index: {}, may-alias: {5,6}]
  %s7 = sld [smem:[#allocation0]]
  $region50: #{_qlayer_forward_impl.1} parent=0
    _
  %s9 = ssub.s32 1, %s7
  %s10 = scalar_select 0, %s9, %s7
  $region1: #{_qlayer_forward_impl.1} parent=0
    #allocation2 [shape = 'u8[512]{0}', space=smem, size = 0x200, scoped, tag = 'input window, operand 0, single buffered']
    #allocation3 [shape = 's32[1]{0}', space=sflag, size = 0x4, scoped, tag = 'scoped memory for _qlayer_forward_impl.1']
    #allocation4 [shape = 'u8[512]{0}', space=smem, size = 0x200, scoped, tag = 'input window, operand 1, single buffered']
    #allocation5 [shape = 's32[1]{0}', space=sflag, size = 0x4, scoped, tag = 'scoped memory for _qlayer_forward_impl.1']
    #allocation6 [shape = 'u8[512]{0}', space=smem, size = 0x200, scoped, tag = 'input window, operand 2, single buffered']
    #allocation7 [shape = 'u8[512]{0}', space=smem, size = 0x200, scoped, tag = 'input window, operand 3, single buffered']
    #allocation8 [shape = 's32[1]{0}', space=sflag, size = 0x4, scoped, tag = 'scoped memory for _qlayer_forward_impl.1']
    %11 = vsyncpa [#allocation3], 0
    %12 = vsyncpa [#allocation5], 0
    %13 = vsyncpa [#allocation8], 0
    // Predicated region
    $region2: #{_qlayer_forward_impl.1} parent=1 // pred_check
      _
    $region3: #{_qlayer_forward_impl.1} parent=1 // pred_check_branch
      %15 = sbr.rel (0) target = $region5
    $region4: #{_qlayer_forward_impl.1} parent=1 // pred_region
      %s17 = ssub.s32 16, 16
      %18 = vsyncadd [#allocation3], %s17
      %s20 = sshll.u32 %s0, 4
      %s21 = int_to_ptr.vmem [resolvable:$true] %s20
      %23 = dma.vmem_to_smem %s21, 16, [#allocation2], [#allocation3]
    $region5: #{_qlayer_forward_impl.1} parent=1 // pred_fallthru
      _
    // Predicated region
    $region6: #{_qlayer_forward_impl.1} parent=1 // pred_check
      _
    $region7: #{_qlayer_forward_impl.1} parent=1 // pred_check_branch
      %25 = sbr.rel (0) target = $region9
    $region8: #{_qlayer_forward_impl.1} parent=1 // pred_region
      %s27 = ssub.s32 16, 16
      %28 = vsyncadd [#allocation5], %s27
      %s30 = sshll.u32 %s1, 4
      %s31 = int_to_ptr.vmem [resolvable:$true] %s30
      %33 = dma.vmem_to_smem %s31, 16, [#allocation4], [#allocation5]
    $region9: #{_qlayer_forward_impl.1} parent=1 // pred_fallthru
      _
    // Predicated region
    $region10: #{_qlayer_forward_impl.1} parent=1 // pred_check
      _
    $region11: #{_qlayer_forward_impl.1} parent=1 // pred_check_branch
      %35 = sbr.rel (0) target = $region13
    $region12: #{_qlayer_forward_impl.1} parent=1 // pred_region
      %s37 = ssub.s32 16, 16
      %38 = vsyncadd [#allocation5], %s37
      %s40 = sshll.u32 %s2, 4
      %s41 = int_to_ptr.vmem [resolvable:$true] %s40
      %43 = dma.vmem_to_smem %s41, 16, [#allocation6], [#allocation5]
    $region13: #{_qlayer_forward_impl.1} parent=1 // pred_fallthru
      _
    // Predicated region
    $region14: #{_qlayer_forward_impl.1} parent=1 // pred_check
      _
    $region15: #{_qlayer_forward_impl.1} parent=1 // pred_check_branch
      %45 = sbr.rel (0) target = $region17
    $region16: #{_qlayer_forward_impl.1} parent=1 // pred_region
      %s47 = ssub.s32 16, 16
      %48 = vsyncadd [#allocation8], %s47
      %s50 = sshll.u32 %s3, 4
      %s51 = int_to_ptr.vmem [resolvable:$true] %s50
      %53 = dma.vmem_to_smem %s51, 16, [#allocation7], [#allocation8]
    $region17: #{_qlayer_forward_impl.1} parent=1 // pred_fallthru
      _
    // Predicated region
    $region18: #{_qlayer_forward_impl.1} parent=1 // pred_check
      _
    $region19: #{_qlayer_forward_impl.1} parent=1 // pred_check_branch
      %55 = sbr.rel (0) target = $region21
    $region20: #{_qlayer_forward_impl.1} parent=1 // pred_region
      _
    $region21: #{_qlayer_forward_impl.1} parent=1 // pred_fallthru
      _
    // Predicated region
    $region22: #{_qlayer_forward_impl.1} parent=1 // pred_check
      _
    $region23: #{_qlayer_forward_impl.1} parent=1 // pred_check_branch
      %57 = sbr.rel (0) target = $region25
    $region24: #{_qlayer_forward_impl.1} parent=1 // pred_region
      _
    $region25: #{_qlayer_forward_impl.1} parent=1 // pred_fallthru
      _
    // Predicated region
    $region26: #{_qlayer_forward_impl.1} parent=1 // pred_check
      _
    $region27: #{_qlayer_forward_impl.1} parent=1 // pred_check_branch
      %59 = sbr.rel (0) target = $region29
    $region28: #{_qlayer_forward_impl.1} parent=1 // pred_region
      %60 = dma.done [#allocation3], 16
    $region29: #{_qlayer_forward_impl.1} parent=1 // pred_fallthru
      _
    // Predicated region
    $region30: #{_qlayer_forward_impl.1} parent=1 // pred_check
      _
    $region31: #{_qlayer_forward_impl.1} parent=1 // pred_check_branch
      %62 = sbr.rel (0) target = $region33
    $region32: #{_qlayer_forward_impl.1} parent=1 // pred_region
      %63 = dma.done [#allocation5], 16
    $region33: #{_qlayer_forward_impl.1} parent=1 // pred_fallthru
      _
    // Predicated region
    $region34: #{_qlayer_forward_impl.1} parent=1 // pred_check
      _
    $region35: #{_qlayer_forward_impl.1} parent=1 // pred_check_branch
      %65 = sbr.rel (0) target = $region37
    $region36: #{_qlayer_forward_impl.1} parent=1 // pred_region
      %66 = dma.done [#allocation5], 16
    $region37: #{_qlayer_forward_impl.1} parent=1 // pred_fallthru
      _
    // Predicated region
    $region38: #{_qlayer_forward_impl.1} parent=1 // pred_check
      _
    $region39: #{_qlayer_forward_impl.1} parent=1 // pred_check_branch
      %68 = sbr.rel (0) target = $region41
    $region40: #{_qlayer_forward_impl.1} parent=1 // pred_region
      %69 = dma.done [#allocation8], 16
    $region41: #{_qlayer_forward_impl.1} parent=1 // pred_fallthru
      _
    %70 = sfence
    %v71 = vld [vmem:[%s5] sm:$0xff]
    %s72 = scalar_lea.vmem %s5, 8
    %v73 = vld [vmem:[%s72] sm:$0xff]
    %s74 = scalar_lea.vmem %s5, 16
    %v75 = vld [vmem:[%s74] sm:$0xff]
    %s76 = scalar_lea.vmem %s5, 24
    %v77 = vld [vmem:[%s76] sm:$0xff]
    %s78 = scalar_lea.vmem %s5, 32
    %v79 = vld [vmem:[%s78] sm:$0xff]
    %s80 = scalar_lea.vmem %s5, 40
    %v81 = vld [vmem:[%s80] sm:$0xff]
    %s82 = scalar_lea.vmem %s5, 48
    %v83 = vld [vmem:[%s82] sm:$0xff]
    %s84 = scalar_lea.vmem %s5, 56
    %v85 = vld [vmem:[%s84] sm:$0xff]
    %s86 = sld [smem:[#allocation2]]
    %s87 = sld [smem:[#allocation4]]
    %v88 = vld [vmem:[%s4] sm:$0xff]
    %v89 = vstv %s87
    %v90 = vmul.f32 %v89, %v88
    %v91 = vstv %s86
    %v92 = vadd.f32 %v91, %v90
    %v93 = vand.u32 2147483647, %v92
    %vm94 = vcmp.le.f32.partialorder %v93, 0.7853982
    %vm95 = vcmp.lt.s32.totalorder %v92, 0
    %v96 = vand.u32 %v92, 2139095040
    %v97 = vshrl.u32 %v96, 23
    %v98 = vsub.s32 %v97, 127
    %v99 = vand.u32 2147483647, %v92
    %v100 = vand.u32 %v99, 8388607
    %v101 = vor.u32 %v100, 8388608
    %v102 = vsub.s32 0, %v101
    %v103 = vadd.s32 %v98, 1
    %vm104 = vcmp.gt.s32.totalorder %v103, 0
    %v105 = vsel %vm104, %v103, 0
    %v106 = vshrl.u32 %v105, 5
    %v107 = vand.u32 %v105, 31
    %v108 = vsub.s32 32, %v107
    %v109 = vshrl.u32 683565275, %v108
    %v110 = vshll.u32 683565275, %v107
    %v111 = vshrl.u32 2475754826, %v108
    %v112 = vor.u32 %v110, %v111
    %v113 = vshll.u32 2475754826, %v107
    %v114 = vshrl.u32 2131351028, %v108
    %v115 = vor.u32 %v113, %v114
    %v116 = vshll.u32 2131351028, %v107
    %v117 = vshrl.u32 2102212464, %v108
    %v118 = vor.u32 %v116, %v117
    %v119 = vshll.u32 2102212464, %v107
    %v120 = vshrl.u32 920167782, %v108
    %v121 = vor.u32 %v119, %v120
    %v122 = vshll.u32 920167782, %v107
    %v123 = vshrl.u32 1326507024, %v108
    %v124 = vor.u32 %v122, %v123
    %vm125 = vcmp.lt.s32.totalorder %v106, 1
    %vm126 = vcmp.lt.s32.totalorder %v106, 2
    %vm127 = vcmp.lt.s32.totalorder %v106, 3
    %vm128 = vcmp.lt.s32.totalorder %v106, 4
    %v129 = vsel %vm125, %v109, %v112
    %v130 = vsel %vm128, %v118, 2102212464
    %v131 = vsel %vm127, %v115, %v130
    %v132 = vsel %vm126, %v129, %v131
    %v133 = vsel %vm125, %v112, %v115
    %v134 = vsel %vm128, %v121, 920167782
    %v135 = vsel %vm127, %v118, %v134
    %v136 = vsel %vm126, %v133, %v135
    %v137 = vsel %vm125, %v115, %v118
    %v138 = vsel %vm128, %v124, 1326507024
    %v139 = vsel %vm127, %v121, %v138
    %v140 = vsel %vm126, %v137, %v139
    %v141 = vshll.u32 %v101, 8
    %v142 = vmul.u32.u64.compose %v141, %v140
    %v143 = vextract.low.u32 %v142
    %v144 = vextract.high.u32 %v142
    %v145 = vmul.u32.u64.compose %v141, %v136
    %v146 = vextract.low.u32 %v145
    %v147 = vextract.high.u32 %v145
    %v148 = vmul.u32 %v141, %v132
    %v149 = vadd.s32 %v144, %v146
    %vm150 = vc.u32 %v144, %v146
    %v151 = vadd.s32 %v147, 1
    %v152 = vsel %vm150, %v151, %v147
    %v153 = vadd.s32 %v148, %v152
    %v154 = vadd.s32 %v153, 536870912
    %v155 = vshrl.u32 %v154, 30
    %v156 = vshll.u32 %v155, 30
    %v157 = vsub.s32 %v153, %v156
    %vm158 = vcmp.lt.s32.totalorder %v157, 0
    %v159 = vsub.s32 0, %v157
    %v160 = vsel %vm158, %v159, %v157
    %v161 = vclz %v160
    %v162 = vsub.s32 %v161, 2
    %vm163 = vcmp.gt.s32.totalorder 0, %v162
    %v164 = vsel %vm163, 0, %v162
    %v165 = vsub.s32 32, %v164
    %v166 = vshll.u32 %v157, %v164
    %v167 = vshrl.u32 %v149, %v165
    %v168 = vor.u32 %v166, %v167
    %v169 = vsub.s32 4294967266, %v164
    %v170 = vadd.s32 %v169, 127
    %v171 = vshll.u32 %v170, 23
    %v172 = vor.u32 4788187, %v171
    %v173 = vand.u32 2147483647, %v172
    %v175 = vcvt.s32.f32 %v168
    %v176 = vmul.f32 %v175, %v173
    %v177 = vxor.u32 %v176, 2147483648
    %v178 = vsel %vm95, %v177, %v176
    %v179 = vsub.s32 4, %v155
    %v180 = vsel %vm95, %v179, %v155
    %v181 = vsel %vm94, %v92, %v178
    %v182 = vsel %vm94, 0, %v180
    %v183 = vcosq.f32.pop %v181
    %v184 = vsinq.f32.pop %v181
    %vm185 = vweird.f32 %v92
    %v186 = vand.u32 %v182, 3
    %vm187 = vcmp.lt.s32.totalorder %v186, 2
    %vm188 = vcmp.eq.s32.totalorder %v186, 0
    %v189 = vxor.u32 %v184, 2147483648
    %v190 = vsel %vm188, %v183, %v189
    %vm191 = vcmp.eq.s32.totalorder %v186, 2
    %v192 = vxor.u32 %v183, 2147483648
    %v193 = vsel %vm191, %v192, %v184
    %v194 = vsel %vm187, %v190, %v193
    %v195 = vsel %vm185, nan, %v194
    %v196 = vand.u32 2147483647, %v92
    %vm197 = vcmp.le.f32.partialorder %v196, 0.7853982
    %vm198 = vcmp.lt.s32.totalorder %v92, 0
    %v199 = vand.u32 %v92, 2139095040
    %v200 = vshrl.u32 %v199, 23
    %v201 = vsub.s32 %v200, 127
    %v202 = vand.u32 2147483647, %v92
    %v203 = vand.u32 %v202, 8388607
    %v204 = vor.u32 %v203, 8388608
    %v205 = vsub.s32 0, %v204
    %v206 = vadd.s32 %v201, 1
    %vm207 = vcmp.gt.s32.totalorder %v206, 0
    %v208 = vsel %vm207, %v206, 0
    %v209 = vshrl.u32 %v208, 5
    %v210 = vand.u32 %v208, 31
    %v211 = vsub.s32 32, %v210
    %v212 = vshrl.u32 683565275, %v211
    %v213 = vshll.u32 683565275, %v210
    %v214 = vshrl.u32 2475754826, %v211
    %v215 = vor.u32 %v213, %v214
    %v216 = vshll.u32 2475754826, %v210
    %v217 = vshrl.u32 2131351028, %v211
    %v218 = vor.u32 %v216, %v217
    %v219 = vshll.u32 2131351028, %v210
    %v220 = vshrl.u32 2102212464, %v211
    %v221 = vor.u32 %v219, %v220
    %v222 = vshll.u32 2102212464, %v210
    %v223 = vshrl.u32 920167782, %v211
    %v224 = vor.u32 %v222, %v223
    %v225 = vshll.u32 920167782, %v210
    %v226 = vshrl.u32 1326507024, %v211
    %v227 = vor.u32 %v225, %v226
    %vm228 = vcmp.lt.s32.totalorder %v209, 1
    %vm229 = vcmp.lt.s32.totalorder %v209, 2
    %vm230 = vcmp.lt.s32.totalorder %v209, 3
    %vm231 = vcmp.lt.s32.totalorder %v209, 4
    %v232 = vsel %vm228, %v212, %v215
    %v233 = vsel %vm231, %v221, 2102212464
    %v234 = vsel %vm230, %v218, %v233
    %v235 = vsel %vm229, %v232, %v234
    %v236 = vsel %vm228, %v215, %v218
    %v237 = vsel %vm231, %v224, 920167782
    %v238 = vsel %vm230, %v221, %v237
    %v239 = vsel %vm229, %v236, %v238
    %v240 = vsel %vm228, %v218, %v221
    %v241 = vsel %vm231, %v227, 1326507024
    %v242 = vsel %vm230, %v224, %v241
    %v243 = vsel %vm229, %v240, %v242
    %v244 = vshll.u32 %v204, 8
    %v245 = vmul.u32.u64.compose %v244, %v243
    %v246 = vextract.low.u32 %v245
    %v247 = vextract.high.u32 %v245
    %v248 = vmul.u32.u64.compose %v244, %v239
    %v249 = vextract.low.u32 %v248
    %v250 = vextract.high.u32 %v248
    %v251 = vmul.u32 %v244, %v235
    %v252 = vadd.s32 %v247, %v249
    %vm253 = vc.u32 %v247, %v249
    %v254 = vadd.s32 %v250, 1
    %v255 = vsel %vm253, %v254, %v250
    %v256 = vadd.s32 %v251, %v255
    %v257 = vadd.s32 %v256, 536870912
    %v258 = vshrl.u32 %v257, 30
    %v259 = vshll.u32 %v258, 30
    %v260 = vsub.s32 %v256, %v259
    %vm261 = vcmp.lt.s32.totalorder %v260, 0
    %v262 = vsub.s32 0, %v260
    %v263 = vsel %vm261, %v262, %v260
    %v264 = vclz %v263
    %v265 = vsub.s32 %v264, 2
    %vm266 = vcmp.gt.s32.totalorder 0, %v265
    %v267 = vsel %vm266, 0, %v265
    %v268 = vsub.s32 32, %v267
    %v269 = vshll.u32 %v260, %v267
    %v270 = vshrl.u32 %v252, %v268
    %v271 = vor.u32 %v269, %v270
    %v272 = vsub.s32 4294967266, %v267
    %v273 = vadd.s32 %v272, 127
    %v274 = vshll.u32 %v273, 23
    %v275 = vor.u32 4788187, %v274
    %v276 = vand.u32 2147483647, %v275
    %v278 = vcvt.s32.f32 %v271
    %v279 = vmul.f32 %v278, %v276
    %v280 = vxor.u32 %v279, 2147483648
    %v281 = vsel %vm198, %v280, %v279
    %v282 = vsub.s32 4, %v258
    %v283 = vsel %vm198, %v282, %v258
    %v284 = vsel %vm197, %v92, %v281
    %v285 = vsel %vm197, 0, %v283
    %v286 = vcosq.f32.pop %v284
    %v287 = vsinq.f32.pop %v284
    %vm288 = vweird.f32 %v92
    %v289 = vadd.s32 %v285, 3
    %v290 = vand.u32 %v289, 3
    %vm291 = vcmp.lt.s32.totalorder %v290, 2
    %vm292 = vcmp.eq.s32.totalorder %v290, 0
    %v293 = vxor.u32 %v287, 2147483648
    %v294 = vsel %vm292, %v286, %v293
    %vm295 = vcmp.eq.s32.totalorder %v290, 2
    %v296 = vxor.u32 %v286, 2147483648
    %v297 = vsel %vm295, %v296, %v287
    %v298 = vsel %vm291, %v294, %v297
    %v299 = vsel %vm288, nan, %v298
    %s300 = sld [smem:[#allocation2 + $0x1]]
    %s301 = sld [smem:[#allocation4 + $0x1]]
    %s302 = scalar_lea.vmem %s4, 8
    %v303 = vld [vmem:[%s302] sm:$0xff]
    %v304 = vstv %s301
    %v305 = vmul.f32 %v304, %v303
    %v306 = vstv %s300
    %v307 = vadd.f32 %v306, %v305
    %s308 = sld [smem:[#allocation2 + $0x2]]
    %s309 = sld [smem:[#allocation4 + $0x2]]
    %s310 = scalar_lea.vmem %s4, 16
    %v311 = vld [vmem:[%s310] sm:$0xff]
    %v312 = vstv %s309
    %v313 = vmul.f32 %v312, %v311
    %v314 = vstv %s308
    %v315 = vadd.f32 %v314, %v313
    %v316 = vadd.f32 %v307, %v315
    %v317 = vsub.f32 %v307, %v315
    %v318 = vand.u32 2147483647, %v316
    %vm319 = vcmp.le.f32.partialorder %v318, 0.7853982
    %vm320 = vcmp.lt.s32.totalorder %v316, 0
    %v321 = vand.u32 %v316, 2139095040
    %v322 = vshrl.u32 %v321, 23
    %v323 = vsub.s32 %v322, 127
    %v324 = vand.u32 2147483647, %v316
    %v325 = vand.u32 %v324, 8388607
    %v326 = vor.u32 %v325, 8388608
    %v327 = vsub.s32 0, %v326
    %v328 = vadd.s32 %v323, 1
    %vm329 = vcmp.gt.s32.totalorder %v328, 0
    %v330 = vsel %vm329, %v328, 0
    %v331 = vshrl.u32 %v330, 5
    %v332 = vand.u32 %v330, 31
    %v333 = vsub.s32 32, %v332
    %v334 = vshrl.u32 683565275, %v333
    %v335 = vshll.u32 683565275, %v332
    %v336 = vshrl.u32 2475754826, %v333
    %v337 = vor.u32 %v335, %v336
    %v338 = vshll.u32 2475754826, %v332
    %v339 = vshrl.u32 2131351028, %v333
    %v340 = vor.u32 %v338, %v339
    %v341 = vshll.u32 2131351028, %v332
    %v342 = vshrl.u32 2102212464, %v333
    %v343 = vor.u32 %v341, %v342
    %v344 = vshll.u32 2102212464, %v332
    %v345 = vshrl.u32 920167782, %v333
    %v346 = vor.u32 %v344, %v345
    %v347 = vshll.u32 920167782, %v332
    %v348 = vshrl.u32 1326507024, %v333
    %v349 = vor.u32 %v347, %v348
    %vm350 = vcmp.lt.s32.totalorder %v331, 1
    %vm351 = vcmp.lt.s32.totalorder %v331, 2
    %vm352 = vcmp.lt.s32.totalorder %v331, 3
    %vm353 = vcmp.lt.s32.totalorder %v331, 4
    %v354 = vsel %vm350, %v334, %v337
    %v355 = vsel %vm353, %v343, 2102212464
    %v356 = vsel %vm352, %v340, %v355
    %v357 = vsel %vm351, %v354, %v356
    %v358 = vsel %vm350, %v337, %v340
    %v359 = vsel %vm353, %v346, 920167782
    %v360 = vsel %vm352, %v343, %v359
    %v361 = vsel %vm351, %v358, %v360
    %v362 = vsel %vm350, %v340, %v343
    %v363 = vsel %vm353, %v349, 1326507024
    %v364 = vsel %vm352, %v346, %v363
    %v365 = vsel %vm351, %v362, %v364
    %v366 = vshll.u32 %v326, 8
    %v367 = vmul.u32.u64.compose %v366, %v365
    %v368 = vextract.low.u32 %v367
    %v369 = vextract.high.u32 %v367
    %v370 = vmul.u32.u64.compose %v366, %v361
    %v371 = vextract.low.u32 %v370
    %v372 = vextract.high.u32 %v370
    %v373 = vmul.u32 %v366, %v357
    %v374 = vadd.s32 %v369, %v371
    %vm375 = vc.u32 %v369, %v371
    %v376 = vadd.s32 %v372, 1
    %v377 = vsel %vm375, %v376, %v372
    %v378 = vadd.s32 %v373, %v377
    %v379 = vadd.s32 %v378, 536870912
    %v380 = vshrl.u32 %v379, 30
    %v381 = vshll.u32 %v380, 30
    %v382 = vsub.s32 %v378, %v381
    %vm383 = vcmp.lt.s32.totalorder %v382, 0
    %v384 = vsub.s32 0, %v382
    %v385 = vsel %vm383, %v384, %v382
    %v386 = vclz %v385
    %v387 = vsub.s32 %v386, 2
    %vm388 = vcmp.gt.s32.totalorder 0, %v387
    %v389 = vsel %vm388, 0, %v387
    %v390 = vsub.s32 32, %v389
    %v391 = vshll.u32 %v382, %v389
    %v392 = vshrl.u32 %v374, %v390
    %v393 = vor.u32 %v391, %v392
    %v394 = vsub.s32 4294967266, %v389
    %v395 = vadd.s32 %v394, 127
    %v396 = vshll.u32 %v395, 23
    %v397 = vor.u32 4788187, %v396
    %v398 = vand.u32 2147483647, %v397
    %v400 = vcvt.s32.f32 %v393
    %v401 = vmul.f32 %v400, %v398
    %v402 = vxor.u32 %v401, 2147483648
    %v403 = vsel %vm320, %v402, %v401
    %v404 = vsub.s32 4, %v380
    %v405 = vsel %vm320, %v404, %v380
    %v406 = vsel %vm319, %v316, %v403
    %v407 = vsel %vm319, 0, %v405
    %v408 = vcosq.f32.pop %v406
    %v409 = vsinq.f32.pop %v406
    %vm410 = vweird.f32 %v316
    %v411 = vand.u32 %v407, 3
    %vm412 = vcmp.lt.s32.totalorder %v411, 2
    %vm413 = vcmp.eq.s32.totalorder %v411, 0
    %v414 = vxor.u32 %v409, 2147483648
    %v415 = vsel %vm413, %v408, %v414
    %vm416 = vcmp.eq.s32.totalorder %v411, 2
    %v417 = vxor.u32 %v408, 2147483648
    %v418 = vsel %vm416, %v417, %v409
    %v419 = vsel %vm412, %v415, %v418
    %v420 = vsel %vm410, nan, %v419
    %v421 = vand.u32 2147483647, %v316
    %vm422 = vcmp.le.f32.partialorder %v421, 0.7853982
    %vm423 = vcmp.lt.s32.totalorder %v316, 0
    %v424 = vand.u32 %v316, 2139095040
    %v425 = vshrl.u32 %v424, 23
    %v426 = vsub.s32 %v425, 127
    %v427 = vand.u32 2147483647, %v316
    %v428 = vand.u32 %v427, 8388607
    %v429 = vor.u32 %v428, 8388608
    %v430 = vsub.s32 0, %v429
    %v431 = vadd.s32 %v426, 1
    %vm432 = vcmp.gt.s32.totalorder %v431, 0
    %v433 = vsel %vm432, %v431, 0
    %v434 = vshrl.u32 %v433, 5
    %v435 = vand.u32 %v433, 31
    %v436 = vsub.s32 32, %v435
    %v437 = vshrl.u32 683565275, %v436
    %v438 = vshll.u32 683565275, %v435
    %v439 = vshrl.u32 2475754826, %v436
    %v440 = vor.u32 %v438, %v439
    %v441 = vshll.u32 2475754826, %v435
    %v442 = vshrl.u32 2131351028, %v436
    %v443 = vor.u32 %v441, %v442
    %v444 = vshll.u32 2131351028, %v435
    %v445 = vshrl.u32 2102212464, %v436
    %v446 = vor.u32 %v444, %v445
    %v447 = vshll.u32 2102212464, %v435
    %v448 = vshrl.u32 920167782, %v436
    %v449 = vor.u32 %v447, %v448
    %v450 = vshll.u32 920167782, %v435
    %v451 = vshrl.u32 1326507024, %v436
    %v452 = vor.u32 %v450, %v451
    %vm453 = vcmp.lt.s32.totalorder %v434, 1
    %vm454 = vcmp.lt.s32.totalorder %v434, 2
    %vm455 = vcmp.lt.s32.totalorder %v434, 3
    %vm456 = vcmp.lt.s32.totalorder %v434, 4
    %v457 = vsel %vm453, %v437, %v440
    %v458 = vsel %vm456, %v446, 2102212464
    %v459 = vsel %vm455, %v443, %v458
    %v460 = vsel %vm454, %v457, %v459
    %v461 = vsel %vm453, %v440, %v443
    %v462 = vsel %vm456, %v449, 920167782
    %v463 = vsel %vm455, %v446, %v462
    %v464 = vsel %vm454, %v461, %v463
    %v465 = vsel %vm453, %v443, %v446
    %v466 = vsel %vm456, %v452, 1326507024
    %v467 = vsel %vm455, %v449, %v466
    %v468 = vsel %vm454, %v465, %v467
    %v469 = vshll.u32 %v429, 8
    %v470 = vmul.u32.u64.compose %v469, %v468
    %v471 = vextract.low.u32 %v470
    %v472 = vextract.high.u32 %v470
    %v473 = vmul.u32.u64.compose %v469, %v464
    %v474 = vextract.low.u32 %v473
    %v475 = vextract.high.u32 %v473
    %v476 = vmul.u32 %v469, %v460
    %v477 = vadd.s32 %v472, %v474
    %vm478 = vc.u32 %v472, %v474
    %v479 = vadd.s32 %v475, 1
    %v480 = vsel %vm478, %v479, %v475
    %v481 = vadd.s32 %v476, %v480
    %v482 = vadd.s32 %v481, 536870912
    %v483 = vshrl.u32 %v482, 30
    %v484 = vshll.u32 %v483, 30
    %v485 = vsub.s32 %v481, %v484
    %vm486 = vcmp.lt.s32.totalorder %v485, 0
    %v487 = vsub.s32 0, %v485
    %v488 = vsel %vm486, %v487, %v485
    %v489 = vclz %v488
    %v490 = vsub.s32 %v489, 2
    %vm491 = vcmp.gt.s32.totalorder 0, %v490
    %v492 = vsel %vm491, 0, %v490
    %v493 = vsub.s32 32, %v492
    %v494 = vshll.u32 %v485, %v492
    %v495 = vshrl.u32 %v477, %v493
    %v496 = vor.u32 %v494, %v495
    %v497 = vsub.s32 4294967266, %v492
    %v498 = vadd.s32 %v497, 127
    %v499 = vshll.u32 %v498, 23
    %v500 = vor.u32 4788187, %v499
    %v501 = vand.u32 2147483647, %v500
    %v503 = vcvt.s32.f32 %v496
    %v504 = vmul.f32 %v503, %v501
    %v505 = vxor.u32 %v504, 2147483648
    %v506 = vsel %vm423, %v505, %v504
    %v507 = vsub.s32 4, %v483
    %v508 = vsel %vm423, %v507, %v483
    %v509 = vsel %vm422, %v316, %v506
    %v510 = vsel %vm422, 0, %v508
    %v511 = vcosq.f32.pop %v509
    %v512 = vsinq.f32.pop %v509
    %vm513 = vweird.f32 %v316
    %v514 = vadd.s32 %v510, 3
    %v515 = vand.u32 %v514, 3
    %vm516 = vcmp.lt.s32.totalorder %v515, 2
    %vm517 = vcmp.eq.s32.totalorder %v515, 0
    %v518 = vxor.u32 %v512, 2147483648
    %v519 = vsel %vm517, %v511, %v518
    %vm520 = vcmp.eq.s32.totalorder %v515, 2
    %v521 = vxor.u32 %v511, 2147483648
    %v522 = vsel %vm520, %v521, %v512
    %v523 = vsel %vm516, %v519, %v522
    %v524 = vsel %vm513, nan, %v523
    %v525 = vand.u32 2147483647, %v317
    %vm526 = vcmp.le.f32.partialorder %v525, 0.7853982
    %vm527 = vcmp.lt.s32.totalorder %v317, 0
    %v528 = vand.u32 %v317, 2139095040
    %v529 = vshrl.u32 %v528, 23
    %v530 = vsub.s32 %v529, 127
    %v531 = vand.u32 2147483647, %v317
    %v532 = vand.u32 %v531, 8388607
    %v533 = vor.u32 %v532, 8388608
    %v534 = vsub.s32 0, %v533
    %v535 = vadd.s32 %v530, 1
    %vm536 = vcmp.gt.s32.totalorder %v535, 0
    %v537 = vsel %vm536, %v535, 0
    %v538 = vshrl.u32 %v537, 5
    %v539 = vand.u32 %v537, 31
    %v540 = vsub.s32 32, %v539
    %v541 = vshrl.u32 683565275, %v540
    %v542 = vshll.u32 683565275, %v539
    %v543 = vshrl.u32 2475754826, %v540
    %v544 = vor.u32 %v542, %v543
    %v545 = vshll.u32 2475754826, %v539
    %v546 = vshrl.u32 2131351028, %v540
    %v547 = vor.u32 %v545, %v546
    %v548 = vshll.u32 2131351028, %v539
    %v549 = vshrl.u32 2102212464, %v540
    %v550 = vor.u32 %v548, %v549
    %v551 = vshll.u32 2102212464, %v539
    %v552 = vshrl.u32 920167782, %v540
    %v553 = vor.u32 %v551, %v552
    %v554 = vshll.u32 920167782, %v539
    %v555 = vshrl.u32 1326507024, %v540
    %v556 = vor.u32 %v554, %v555
    %vm557 = vcmp.lt.s32.totalorder %v538, 1
    %vm558 = vcmp.lt.s32.totalorder %v538, 2
    %vm559 = vcmp.lt.s32.totalorder %v538, 3
    %vm560 = vcmp.lt.s32.totalorder %v538, 4
    %v561 = vsel %vm557, %v541, %v544
    %v562 = vsel %vm560, %v550, 2102212464
    %v563 = vsel %vm559, %v547, %v562
    %v564 = vsel %vm558, %v561, %v563
    %v565 = vsel %vm557, %v544, %v547
    %v566 = vsel %vm560, %v553, 920167782
    %v567 = vsel %vm559, %v550, %v566
    %v568 = vsel %vm558, %v565, %v567
    %v569 = vsel %vm557, %v547, %v550
    %v570 = vsel %vm560, %v556, 1326507024
    %v571 = vsel %vm559, %v553, %v570
    %v572 = vsel %vm558, %v569, %v571
    %v573 = vshll.u32 %v533, 8
    %v574 = vmul.u32.u64.compose %v573, %v572
    %v575 = vextract.low.u32 %v574
    %v576 = vextract.high.u32 %v574
    %v577 = vmul.u32.u64.compose %v573, %v568
    %v578 = vextract.low.u32 %v577
    %v579 = vextract.high.u32 %v577
    %v580 = vmul.u32 %v573, %v564
    %v581 = vadd.s32 %v576, %v578
    %vm582 = vc.u32 %v576, %v578
    %v583 = vadd.s32 %v579, 1
    %v584 = vsel %vm582, %v583, %v579
    %v585 = vadd.s32 %v580, %v584
    %v586 = vadd.s32 %v585, 536870912
    %v587 = vshrl.u32 %v586, 30
    %v588 = vshll.u32 %v587, 30
    %v589 = vsub.s32 %v585, %v588
    %vm590 = vcmp.lt.s32.totalorder %v589, 0
    %v591 = vsub.s32 0, %v589
    %v592 = vsel %vm590, %v591, %v589
    %v593 = vclz %v592
    %v594 = vsub.s32 %v593, 2
    %vm595 = vcmp.gt.s32.totalorder 0, %v594
    %v596 = vsel %vm595, 0, %v594
    %v597 = vsub.s32 32, %v596
    %v598 = vshll.u32 %v589, %v596
    %v599 = vshrl.u32 %v581, %v597
    %v600 = vor.u32 %v598, %v599
    %v601 = vsub.s32 4294967266, %v596
    %v602 = vadd.s32 %v601, 127
    %v603 = vshll.u32 %v602, 23
    %v604 = vor.u32 4788187, %v603
    %v605 = vand.u32 2147483647, %v604
    %v607 = vcvt.s32.f32 %v600
    %v608 = vmul.f32 %v607, %v605
    %v609 = vxor.u32 %v608, 2147483648
    %v610 = vsel %vm527, %v609, %v608
    %v611 = vsub.s32 4, %v587
    %v612 = vsel %vm527, %v611, %v587
    %v613 = vsel %vm526, %v317, %v610
    %v614 = vsel %vm526, 0, %v612
    %v615 = vcosq.f32.pop %v613
    %v616 = vsinq.f32.pop %v613
    %vm617 = vweird.f32 %v317
    %v618 = vand.u32 %v614, 3
    %vm619 = vcmp.lt.s32.totalorder %v618, 2
    %vm620 = vcmp.eq.s32.totalorder %v618, 0
    %v621 = vxor.u32 %v616, 2147483648
    %v622 = vsel %vm620, %v615, %v621
    %vm623 = vcmp.eq.s32.totalorder %v618, 2
    %v624 = vxor.u32 %v615, 2147483648
    %v625 = vsel %vm623, %v624, %v616
    %v626 = vsel %vm619, %v622, %v625
    %v627 = vsel %vm617, nan, %v626
    %v628 = vand.u32 2147483647, %v317
    %vm629 = vcmp.le.f32.partialorder %v628, 0.7853982
    %vm630 = vcmp.lt.s32.totalorder %v317, 0
    %v631 = vand.u32 %v317, 2139095040
    %v632 = vshrl.u32 %v631, 23
    %v633 = vsub.s32 %v632, 127
    %v634 = vand.u32 2147483647, %v317
    %v635 = vand.u32 %v634, 8388607
    %v636 = vor.u32 %v635, 8388608
    %v637 = vsub.s32 0, %v636
    %v638 = vadd.s32 %v633, 1
    %vm639 = vcmp.gt.s32.totalorder %v638, 0
    %v640 = vsel %vm639, %v638, 0
    %v641 = vshrl.u32 %v640, 5
    %v642 = vand.u32 %v640, 31
    %v643 = vsub.s32 32, %v642
    %v644 = vshrl.u32 683565275, %v643
    %v645 = vshll.u32 683565275, %v642
    %v646 = vshrl.u32 2475754826, %v643
    %v647 = vor.u32 %v645, %v646
    %v648 = vshll.u32 2475754826, %v642
    %v649 = vshrl.u32 2131351028, %v643
    %v650 = vor.u32 %v648, %v649
    %v651 = vshll.u32 2131351028, %v642
    %v652 = vshrl.u32 2102212464, %v643
    %v653 = vor.u32 %v651, %v652
    %v654 = vshll.u32 2102212464, %v642
    %v655 = vshrl.u32 920167782, %v643
    %v656 = vor.u32 %v654, %v655
    %v657 = vshll.u32 920167782, %v642
    %v658 = vshrl.u32 1326507024, %v643
    %v659 = vor.u32 %v657, %v658
    %vm660 = vcmp.lt.s32.totalorder %v641, 1
    %vm661 = vcmp.lt.s32.totalorder %v641, 2
    %vm662 = vcmp.lt.s32.totalorder %v641, 3
    %vm663 = vcmp.lt.s32.totalorder %v641, 4
    %v664 = vsel %vm660, %v644, %v647
    %v665 = vsel %vm663, %v653, 2102212464
    %v666 = vsel %vm662, %v650, %v665
    %v667 = vsel %vm661, %v664, %v666
    %v668 = vsel %vm660, %v647, %v650
    %v669 = vsel %vm663, %v656, 920167782
    %v670 = vsel %vm662, %v653, %v669
    %v671 = vsel %vm661, %v668, %v670
    %v672 = vsel %vm660, %v650, %v653
    %v673 = vsel %vm663, %v659, 1326507024
    %v674 = vsel %vm662, %v656, %v673
    %v675 = vsel %vm661, %v672, %v674
    %v676 = vshll.u32 %v636, 8
    %v677 = vmul.u32.u64.compose %v676, %v675
    %v678 = vextract.low.u32 %v677
    %v679 = vextract.high.u32 %v677
    %v680 = vmul.u32.u64.compose %v676, %v671
    %v681 = vextract.low.u32 %v680
    %v682 = vextract.high.u32 %v680
    %v683 = vmul.u32 %v676, %v667
    %v684 = vadd.s32 %v679, %v681
    %vm685 = vc.u32 %v679, %v681
    %v686 = vadd.s32 %v682, 1
    %v687 = vsel %vm685, %v686, %v682
    %v688 = vadd.s32 %v683, %v687
    %v689 = vadd.s32 %v688, 536870912
    %v690 = vshrl.u32 %v689, 30
    %v691 = vshll.u32 %v690, 30
    %v692 = vsub.s32 %v688, %v691
    %vm693 = vcmp.lt.s32.totalorder %v692, 0
    %v694 = vsub.s32 0, %v692
    %v695 = vsel %vm693, %v694, %v692
    %v696 = vclz %v695
    %v697 = vsub.s32 %v696, 2
    %vm698 = vcmp.gt.s32.totalorder 0, %v697
    %v699 = vsel %vm698, 0, %v697
    %v700 = vsub.s32 32, %v699
    %v701 = vshll.u32 %v692, %v699
    %v702 = vshrl.u32 %v684, %v700
    %v703 = vor.u32 %v701, %v702
    %v704 = vsub.s32 4294967266, %v699
    %v705 = vadd.s32 %v704, 127
    %v706 = vshll.u32 %v705, 23
    %v707 = vor.u32 4788187, %v706
    %v708 = vand.u32 2147483647, %v707
    %v710 = vcvt.s32.f32 %v703
    %v711 = vmul.f32 %v710, %v708
    %v712 = vxor.u32 %v711, 2147483648
    %v713 = vsel %vm630, %v712, %v711
    %v714 = vsub.s32 4, %v690
    %v715 = vsel %vm630, %v714, %v690
    %v716 = vsel %vm629, %v317, %v713
    %v717 = vsel %vm629, 0, %v715
    %v718 = vcosq.f32.pop %v716
    %v719 = vsinq.f32.pop %v716
    %vm720 = vweird.f32 %v317
    %v721 = vadd.s32 %v717, 3
    %v722 = vand.u32 %v721, 3
    %vm723 = vcmp.lt.s32.totalorder %v722, 2
    %vm724 = vcmp.eq.s32.totalorder %v722, 0
    %v725 = vxor.u32 %v719, 2147483648
    %v726 = vsel %vm724, %v718, %v725
    %vm727 = vcmp.eq.s32.totalorder %v722, 2
    %v728 = vxor.u32 %v718, 2147483648
    %v729 = vsel %vm727, %v728, %v719
    %v730 = vsel %vm723, %v726, %v729
    %v731 = vsel %vm720, nan, %v730
    %v732 = vmul.f32 %v195, %v420
    %v733 = vmul.f32 %v195, %v524
    %v734 = vmul.f32 %v299, %v627
    %v735 = vmul.f32 %v299, %v731
    %v736 = vmul.f32 %v732, %v71
    %v737 = vmul.f32 %v733, %v79
    %v738 = vsub.f32 %v736, %v737
    %v739 = vmul.f32 %v734, %v75
    %v740 = vsub.f32 %v738, %v739
    %v741 = vmul.f32 %v735, %v83
    %v742 = vadd.f32 %v740, %v741
    %v743 = vmul.f32 %v732, %v79
    %v744 = vmul.f32 %v733, %v71
    %v745 = vadd.f32 %v743, %v744
    %v746 = vmul.f32 %v734, %v83
    %v747 = vsub.f32 %v745, %v746
    %v748 = vmul.f32 %v735, %v75
    %v749 = vsub.f32 %v747, %v748
    %v750 = vmul.f32 %v732, %v73
    %v751 = vmul.f32 %v733, %v81
    %v752 = vsub.f32 %v750, %v751
    %v753 = vmul.f32 %v734, %v77
    %v754 = vsub.f32 %v752, %v753
    %v755 = vmul.f32 %v735, %v85
    %v756 = vadd.f32 %v754, %v755
    %v757 = vmul.f32 %v732, %v81
    %v758 = vmul.f32 %v733, %v73
    %v759 = vadd.f32 %v757, %v758
    %v760 = vmul.f32 %v734, %v85
    %v761 = vsub.f32 %v759, %v760
    %v762 = vmul.f32 %v735, %v77
    %v763 = vsub.f32 %v761, %v762
    %v764 = vmul.f32 %v734, %v71
    %v765 = vmul.f32 %v735, %v79
    %v766 = vadd.f32 %v764, %v765
    %v767 = vmul.f32 %v732, %v75
    %v768 = vadd.f32 %v766, %v767
    %v769 = vmul.f32 %v733, %v83
    %v770 = vadd.f32 %v768, %v769
    %v771 = vmul.f32 %v734, %v79
    %v772 = vmul.f32 %v735, %v71
    %v773 = vsub.f32 %v771, %v772
    %v774 = vmul.f32 %v732, %v83
    %v775 = vadd.f32 %v773, %v774
    %v776 = vmul.f32 %v733, %v75
    %v777 = vsub.f32 %v775, %v776
    %v778 = vmul.f32 %v734, %v73
    %v779 = vmul.f32 %v735, %v81
    %v780 = vadd.f32 %v778, %v779
    %v781 = vmul.f32 %v732, %v77
    %v782 = vadd.f32 %v780, %v781
    %v783 = vmul.f32 %v733, %v85
    %v784 = vadd.f32 %v782, %v783
    %v785 = vmul.f32 %v734, %v81
    %v786 = vmul.f32 %v735, %v73
    %v787 = vsub.f32 %v785, %v786
    %v788 = vmul.f32 %v732, %v85
    %v789 = vadd.f32 %v787, %v788
    %v790 = vmul.f32 %v733, %v77
    %v791 = vsub.f32 %v789, %v790
    %v792 = vmul.f32 %v732, %v742
    %v793 = vmul.f32 %v733, %v749
    %v794 = vadd.f32 %v792, %v793
    %v795 = vmul.f32 %v734, %v756
    %v796 = vsub.f32 %v794, %v795
    %v797 = vmul.f32 %v735, %v763
    %v798 = vsub.f32 %v796, %v797
    %v799 = vmul.f32 %v732, %v749
    %v800 = vmul.f32 %v733, %v742
    %v801 = vsub.f32 %v799, %v800
    %v802 = vmul.f32 %v734, %v763
    %v803 = vsub.f32 %v801, %v802
    %v804 = vmul.f32 %v735, %v756
    %v805 = vadd.f32 %v803, %v804
    %v806 = vmul.f32 %v734, %v742
    %v807 = vmul.f32 %v735, %v749
    %v808 = vsub.f32 %v806, %v807
    %v809 = vmul.f32 %v732, %v756
    %v810 = vadd.f32 %v808, %v809
    %v811 = vmul.f32 %v733, %v763
    %v812 = vsub.f32 %v810, %v811
    %v813 = vmul.f32 %v734, %v749
    %v814 = vmul.f32 %v735, %v742
    %v815 = vadd.f32 %v813, %v814
    %v816 = vmul.f32 %v732, %v763
    %v817 = vadd.f32 %v815, %v816
    %v818 = vmul.f32 %v733, %v756
    %v819 = vadd.f32 %v817, %v818
    %v820 = vmul.f32 %v732, %v770
    %v821 = vmul.f32 %v733, %v777
    %v822 = vadd.f32 %v820, %v821
    %v823 = vmul.f32 %v734, %v784
    %v824 = vsub.f32 %v822, %v823
    %v825 = vmul.f32 %v735, %v791
    %v826 = vsub.f32 %v824, %v825
    %v827 = vmul.f32 %v732, %v777
    %v828 = vmul.f32 %v733, %v770
    %v829 = vsub.f32 %v827, %v828
    %v830 = vmul.f32 %v734, %v791
    %v831 = vsub.f32 %v829, %v830
    %v832 = vmul.f32 %v735, %v784
    %v833 = vadd.f32 %v831, %v832
    %v834 = vmul.f32 %v734, %v770
    %v835 = vmul.f32 %v735, %v777
    %v836 = vsub.f32 %v834, %v835
    %v837 = vmul.f32 %v732, %v784
    %v838 = vadd.f32 %v836, %v837
    %v839 = vmul.f32 %v733, %v791
    %v840 = vsub.f32 %v838, %v839
    %v841 = vmul.f32 %v734, %v777
    %v842 = vmul.f32 %v735, %v770
    %v843 = vadd.f32 %v841, %v842
    %v844 = vmul.f32 %v732, %v791
    %v845 = vadd.f32 %v843, %v844
    %v846 = vmul.f32 %v733, %v784
    %v847 = vadd.f32 %v845, %v846
    %s848 = sld [smem:[#allocation2 + $0x3]]
    %s849 = sld [smem:[#allocation4 + $0x3]]
    %s850 = scalar_lea.vmem %s4, 24
    %v851 = vld [vmem:[%s850] sm:$0xff]
    %v852 = vstv %s849
    %v853 = vmul.f32 %v852, %v851
    %v854 = vstv %s848
    %v855 = vadd.f32 %v854, %v853
    %v856 = vand.u32 2147483647, %v855
    %vm857 = vcmp.le.f32.partialorder %v856, 0.7853982
    %vm858 = vcmp.lt.s32.totalorder %v855, 0
    %v859 = vand.u32 %v855, 2139095040
    %v860 = vshrl.u32 %v859, 23
    %v861 = vsub.s32 %v860, 127
    %v862 = vand.u32 2147483647, %v855
    %v863 = vand.u32 %v862, 8388607
    %v864 = vor.u32 %v863, 8388608
    %v865 = vsub.s32 0, %v864
    %v866 = vadd.s32 %v861, 1
    %vm867 = vcmp.gt.s32.totalorder %v866, 0
    %v868 = vsel %vm867, %v866, 0
    %v869 = vshrl.u32 %v868, 5
    %v870 = vand.u32 %v868, 31
    %v871 = vsub.s32 32, %v870
    %v872 = vshrl.u32 683565275, %v871
    %v873 = vshll.u32 683565275, %v870
    %v874 = vshrl.u32 2475754826, %v871
    %v875 = vor.u32 %v873, %v874
    %v876 = vshll.u32 2475754826, %v870
    %v877 = vshrl.u32 2131351028, %v871
    %v878 = vor.u32 %v876, %v877
    %v879 = vshll.u32 2131351028, %v870
    %v880 = vshrl.u32 2102212464, %v871
    %v881 = vor.u32 %v879, %v880
    %v882 = vshll.u32 2102212464, %v870
    %v883 = vshrl.u32 920167782, %v871
    %v884 = vor.u32 %v882, %v883
    %v885 = vshll.u32 920167782, %v870
    %v886 = vshrl.u32 1326507024, %v871
    %v887 = vor.u32 %v885, %v886
    %vm888 = vcmp.lt.s32.totalorder %v869, 1
    %vm889 = vcmp.lt.s32.totalorder %v869, 2
    %vm890 = vcmp.lt.s32.totalorder %v869, 3
    %vm891 = vcmp.lt.s32.totalorder %v869, 4
    %v892 = vsel %vm888, %v872, %v875
    %v893 = vsel %vm891, %v881, 2102212464
    %v894 = vsel %vm890, %v878, %v893
    %v895 = vsel %vm889, %v892, %v894
    %v896 = vsel %vm888, %v875, %v878
    %v897 = vsel %vm891, %v884, 920167782
    %v898 = vsel %vm890, %v881, %v897
    %v899 = vsel %vm889, %v896, %v898
    %v900 = vsel %vm888, %v878, %v881
    %v901 = vsel %vm891, %v887, 1326507024
    %v902 = vsel %vm890, %v884, %v901
    %v903 = vsel %vm889, %v900, %v902
    %v904 = vshll.u32 %v864, 8
    %v905 = vmul.u32.u64.compose %v904, %v903
    %v906 = vextract.low.u32 %v905
    %v907 = vextract.high.u32 %v905
    %v908 = vmul.u32.u64.compose %v904, %v899
    %v909 = vextract.low.u32 %v908
    %v910 = vextract.high.u32 %v908
    %v911 = vmul.u32 %v904, %v895
    %v912 = vadd.s32 %v907, %v909
    %vm913 = vc.u32 %v907, %v909
    %v914 = vadd.s32 %v910, 1
    %v915 = vsel %vm913, %v914, %v910
    %v916 = vadd.s32 %v911, %v915
    %v917 = vadd.s32 %v916, 536870912
    %v918 = vshrl.u32 %v917, 30
    %v919 = vshll.u32 %v918, 30
    %v920 = vsub.s32 %v916, %v919
    %vm921 = vcmp.lt.s32.totalorder %v920, 0
    %v922 = vsub.s32 0, %v920
    %v923 = vsel %vm921, %v922, %v920
    %v924 = vclz %v923
    %v925 = vsub.s32 %v924, 2
    %vm926 = vcmp.gt.s32.totalorder 0, %v925
    %v927 = vsel %vm926, 0, %v925
    %v928 = vsub.s32 32, %v927
    %v929 = vshll.u32 %v920, %v927
    %v930 = vshrl.u32 %v912, %v928
    %v931 = vor.u32 %v929, %v930
    %v932 = vsub.s32 4294967266, %v927
    %v933 = vadd.s32 %v932, 127
    %v934 = vshll.u32 %v933, 23
    %v935 = vor.u32 4788187, %v934
    %v936 = vand.u32 2147483647, %v935
    %v938 = vcvt.s32.f32 %v931
    %v939 = vmul.f32 %v938, %v936
    %v940 = vxor.u32 %v939, 2147483648
    %v941 = vsel %vm858, %v940, %v939
    %v942 = vsub.s32 4, %v918
    %v943 = vsel %vm858, %v942, %v918
    %v944 = vsel %vm857, %v855, %v941
    %v945 = vsel %vm857, 0, %v943
    %v946 = vcosq.f32.pop %v944
    %v947 = vsinq.f32.pop %v944
    %vm948 = vweird.f32 %v855
    %v949 = vand.u32 %v945, 3
    %vm950 = vcmp.lt.s32.totalorder %v949, 2
    %vm951 = vcmp.eq.s32.totalorder %v949, 0
    %v952 = vxor.u32 %v947, 2147483648
    %v953 = vsel %vm951, %v946, %v952
    %vm954 = vcmp.eq.s32.totalorder %v949, 2
    %v955 = vxor.u32 %v946, 2147483648
    %v956 = vsel %vm954, %v955, %v947
    %v957 = vsel %vm950, %v953, %v956
    %v958 = vsel %vm948, nan, %v957
    %v959 = vand.u32 2147483647, %v855
    %vm960 = vcmp.le.f32.partialorder %v959, 0.7853982
    %vm961 = vcmp.lt.s32.totalorder %v855, 0
    %v962 = vand.u32 %v855, 2139095040
    %v963 = vshrl.u32 %v962, 23
    %v964 = vsub.s32 %v963, 127
    %v965 = vand.u32 2147483647, %v855
    %v966 = vand.u32 %v965, 8388607
    %v967 = vor.u32 %v966, 8388608
    %v968 = vsub.s32 0, %v967
    %v969 = vadd.s32 %v964, 1
    %vm970 = vcmp.gt.s32.totalorder %v969, 0
    %v971 = vsel %vm970, %v969, 0
    %v972 = vshrl.u32 %v971, 5
    %v973 = vand.u32 %v971, 31
    %v974 = vsub.s32 32, %v973
    %v975 = vshrl.u32 683565275, %v974
    %v976 = vshll.u32 683565275, %v973
    %v977 = vshrl.u32 2475754826, %v974
    %v978 = vor.u32 %v976, %v977
    %v979 = vshll.u32 2475754826, %v973
    %v980 = vshrl.u32 2131351028, %v974
    %v981 = vor.u32 %v979, %v980
    %v982 = vshll.u32 2131351028, %v973
    %v983 = vshrl.u32 2102212464, %v974
    %v984 = vor.u32 %v982, %v983
    %v985 = vshll.u32 2102212464, %v973
    %v986 = vshrl.u32 920167782, %v974
    %v987 = vor.u32 %v985, %v986
    %v988 = vshll.u32 920167782, %v973
    %v989 = vshrl.u32 1326507024, %v974
    %v990 = vor.u32 %v988, %v989
    %vm991 = vcmp.lt.s32.totalorder %v972, 1
    %vm992 = vcmp.lt.s32.totalorder %v972, 2
    %vm993 = vcmp.lt.s32.totalorder %v972, 3
    %vm994 = vcmp.lt.s32.totalorder %v972, 4
    %v995 = vsel %vm991, %v975, %v978
    %v996 = vsel %vm994, %v984, 2102212464
    %v997 = vsel %vm993, %v981, %v996
    %v998 = vsel %vm992, %v995, %v997
    %v999 = vsel %vm991, %v978, %v981
    %v1000 = vsel %vm994, %v987, 920167782
    %v1001 = vsel %vm993, %v984, %v1000
    %v1002 = vsel %vm992, %v999, %v1001
    %v1003 = vsel %vm991, %v981, %v984
    %v1004 = vsel %vm994, %v990, 1326507024
    %v1005 = vsel %vm993, %v987, %v1004
    %v1006 = vsel %vm992, %v1003, %v1005
    %v1007 = vshll.u32 %v967, 8
    %v1008 = vmul.u32.u64.compose %v1007, %v1006
    %v1009 = vextract.low.u32 %v1008
    %v1010 = vextract.high.u32 %v1008
    %v1011 = vmul.u32.u64.compose %v1007, %v1002
    %v1012 = vextract.low.u32 %v1011
    %v1013 = vextract.high.u32 %v1011
    %v1014 = vmul.u32 %v1007, %v998
    %v1015 = vadd.s32 %v1010, %v1012
    %vm1016 = vc.u32 %v1010, %v1012
    %v1017 = vadd.s32 %v1013, 1
    %v1018 = vsel %vm1016, %v1017, %v1013
    %v1019 = vadd.s32 %v1014, %v1018
    %v1020 = vadd.s32 %v1019, 536870912
    %v1021 = vshrl.u32 %v1020, 30
    %v1022 = vshll.u32 %v1021, 30
    %v1023 = vsub.s32 %v1019, %v1022
    %vm1024 = vcmp.lt.s32.totalorder %v1023, 0
    %v1025 = vsub.s32 0, %v1023
    %v1026 = vsel %vm1024, %v1025, %v1023
    %v1027 = vclz %v1026
    %v1028 = vsub.s32 %v1027, 2
    %vm1029 = vcmp.gt.s32.totalorder 0, %v1028
    %v1030 = vsel %vm1029, 0, %v1028
    %v1031 = vsub.s32 32, %v1030
    %v1032 = vshll.u32 %v1023, %v1030
    %v1033 = vshrl.u32 %v1015, %v1031
    %v1034 = vor.u32 %v1032, %v1033
    %v1035 = vsub.s32 4294967266, %v1030
    %v1036 = vadd.s32 %v1035, 127
    %v1037 = vshll.u32 %v1036, 23
    %v1038 = vor.u32 4788187, %v1037
    %v1039 = vand.u32 2147483647, %v1038
    %v1041 = vcvt.s32.f32 %v1034
    %v1042 = vmul.f32 %v1041, %v1039
    %v1043 = vxor.u32 %v1042, 2147483648
    %v1044 = vsel %vm961, %v1043, %v1042
    %v1045 = vsub.s32 4, %v1021
    %v1046 = vsel %vm961, %v1045, %v1021
    %v1047 = vsel %vm960, %v855, %v1044
    %v1048 = vsel %vm960, 0, %v1046
    %v1049 = vcosq.f32.pop %v1047
    %v1050 = vsinq.f32.pop %v1047
    %vm1051 = vweird.f32 %v855
    %v1052 = vadd.s32 %v1048, 3
    %v1053 = vand.u32 %v1052, 3
    %vm1054 = vcmp.lt.s32.totalorder %v1053, 2
    %vm1055 = vcmp.eq.s32.totalorder %v1053, 0
    %v1056 = vxor.u32 %v1050, 2147483648
    %v1057 = vsel %vm1055, %v1049, %v1056
    %vm1058 = vcmp.eq.s32.totalorder %v1053, 2
    %v1059 = vxor.u32 %v1049, 2147483648
    %v1060 = vsel %vm1058, %v1059, %v1050
    %v1061 = vsel %vm1054, %v1057, %v1060
    %v1062 = vsel %vm1051, nan, %v1061
    %s1063 = sld [smem:[#allocation2 + $0x4]]
    %s1064 = sld [smem:[#allocation4 + $0x4]]
    %s1065 = scalar_lea.vmem %s4, 32
    %v1066 = vld [vmem:[%s1065] sm:$0xff]
    %v1067 = vstv %s1064
    %v1068 = vmul.f32 %v1067, %v1066
    %v1069 = vstv %s1063
    %v1070 = vadd.f32 %v1069, %v1068
    %v1071 = vand.u32 2147483647, %v1070
    %vm1072 = vcmp.le.f32.partialorder %v1071, 0.7853982
    %vm1073 = vcmp.lt.s32.totalorder %v1070, 0
    %v1074 = vand.u32 %v1070, 2139095040
    %v1075 = vshrl.u32 %v1074, 23
    %v1076 = vsub.s32 %v1075, 127
    %v1077 = vand.u32 2147483647, %v1070
    %v1078 = vand.u32 %v1077, 8388607
    %v1079 = vor.u32 %v1078, 8388608
    %v1080 = vsub.s32 0, %v1079
    %v1081 = vadd.s32 %v1076, 1
    %vm1082 = vcmp.gt.s32.totalorder %v1081, 0
    %v1083 = vsel %vm1082, %v1081, 0
    %v1084 = vshrl.u32 %v1083, 5
    %v1085 = vand.u32 %v1083, 31
    %v1086 = vsub.s32 32, %v1085
    %v1087 = vshrl.u32 683565275, %v1086
    %v1088 = vshll.u32 683565275, %v1085
    %v1089 = vshrl.u32 2475754826, %v1086
    %v1090 = vor.u32 %v1088, %v1089
    %v1091 = vshll.u32 2475754826, %v1085
    %v1092 = vshrl.u32 2131351028, %v1086
    %v1093 = vor.u32 %v1091, %v1092
    %v1094 = vshll.u32 2131351028, %v1085
    %v1095 = vshrl.u32 2102212464, %v1086
    %v1096 = vor.u32 %v1094, %v1095
    %v1097 = vshll.u32 2102212464, %v1085
    %v1098 = vshrl.u32 920167782, %v1086
    %v1099 = vor.u32 %v1097, %v1098
    %v1100 = vshll.u32 920167782, %v1085
    %v1101 = vshrl.u32 1326507024, %v1086
    %v1102 = vor.u32 %v1100, %v1101
    %vm1103 = vcmp.lt.s32.totalorder %v1084, 1
    %vm1104 = vcmp.lt.s32.totalorder %v1084, 2
    %vm1105 = vcmp.lt.s32.totalorder %v1084, 3
    %vm1106 = vcmp.lt.s32.totalorder %v1084, 4
    %v1107 = vsel %vm1103, %v1087, %v1090
    %v1108 = vsel %vm1106, %v1096, 2102212464
    %v1109 = vsel %vm1105, %v1093, %v1108
    %v1110 = vsel %vm1104, %v1107, %v1109
    %v1111 = vsel %vm1103, %v1090, %v1093
    %v1112 = vsel %vm1106, %v1099, 920167782
    %v1113 = vsel %vm1105, %v1096, %v1112
    %v1114 = vsel %vm1104, %v1111, %v1113
    %v1115 = vsel %vm1103, %v1093, %v1096
    %v1116 = vsel %vm1106, %v1102, 1326507024
    %v1117 = vsel %vm1105, %v1099, %v1116
    %v1118 = vsel %vm1104, %v1115, %v1117
    %v1119 = vshll.u32 %v1079, 8
    %v1120 = vmul.u32.u64.compose %v1119, %v1118
    %v1121 = vextract.low.u32 %v1120
    %v1122 = vextract.high.u32 %v1120
    %v1123 = vmul.u32.u64.compose %v1119, %v1114
    %v1124 = vextract.low.u32 %v1123
    %v1125 = vextract.high.u32 %v1123
    %v1126 = vmul.u32 %v1119, %v1110
    %v1127 = vadd.s32 %v1122, %v1124
    %vm1128 = vc.u32 %v1122, %v1124
    %v1129 = vadd.s32 %v1125, 1
    %v1130 = vsel %vm1128, %v1129, %v1125
    %v1131 = vadd.s32 %v1126, %v1130
    %v1132 = vadd.s32 %v1131, 536870912
    %v1133 = vshrl.u32 %v1132, 30
    %v1134 = vshll.u32 %v1133, 30
    %v1135 = vsub.s32 %v1131, %v1134
    %vm1136 = vcmp.lt.s32.totalorder %v1135, 0
    %v1137 = vsub.s32 0, %v1135
    %v1138 = vsel %vm1136, %v1137, %v1135
    %v1139 = vclz %v1138
    %v1140 = vsub.s32 %v1139, 2
    %vm1141 = vcmp.gt.s32.totalorder 0, %v1140
    %v1142 = vsel %vm1141, 0, %v1140
    %v1143 = vsub.s32 32, %v1142
    %v1144 = vshll.u32 %v1135, %v1142
    %v1145 = vshrl.u32 %v1127, %v1143
    %v1146 = vor.u32 %v1144, %v1145
    %v1147 = vsub.s32 4294967266, %v1142
    %v1148 = vadd.s32 %v1147, 127
    %v1149 = vshll.u32 %v1148, 23
    %v1150 = vor.u32 4788187, %v1149
    %v1151 = vand.u32 2147483647, %v1150
    %v1153 = vcvt.s32.f32 %v1146
    %v1154 = vmul.f32 %v1153, %v1151
    %v1155 = vxor.u32 %v1154, 2147483648
    %v1156 = vsel %vm1073, %v1155, %v1154
    %v1157 = vsub.s32 4, %v1133
    %v1158 = vsel %vm1073, %v1157, %v1133
    %v1159 = vsel %vm1072, %v1070, %v1156
    %v1160 = vsel %vm1072, 0, %v1158
    %v1161 = vcosq.f32.pop %v1159
    %v1162 = vsinq.f32.pop %v1159
    %vm1163 = vweird.f32 %v1070
    %v1164 = vand.u32 %v1160, 3
    %vm1165 = vcmp.lt.s32.totalorder %v1164, 2
    %vm1166 = vcmp.eq.s32.totalorder %v1164, 0
    %v1167 = vxor.u32 %v1162, 2147483648
    %v1168 = vsel %vm1166, %v1161, %v1167
    %vm1169 = vcmp.eq.s32.totalorder %v1164, 2
    %v1170 = vxor.u32 %v1161, 2147483648
    %v1171 = vsel %vm1169, %v1170, %v1162
    %v1172 = vsel %vm1165, %v1168, %v1171
    %v1173 = vsel %vm1163, nan, %v1172
    %v1174 = vand.u32 2147483647, %v1070
    %vm1175 = vcmp.le.f32.partialorder %v1174, 0.7853982
    %vm1176 = vcmp.lt.s32.totalorder %v1070, 0
    %v1177 = vand.u32 %v1070, 2139095040
    %v1178 = vshrl.u32 %v1177, 23
    %v1179 = vsub.s32 %v1178, 127
    %v1180 = vand.u32 2147483647, %v1070
    %v1181 = vand.u32 %v1180, 8388607
    %v1182 = vor.u32 %v1181, 8388608
    %v1183 = vsub.s32 0, %v1182
    %v1184 = vadd.s32 %v1179, 1
    %vm1185 = vcmp.gt.s32.totalorder %v1184, 0
    %v1186 = vsel %vm1185, %v1184, 0
    %v1187 = vshrl.u32 %v1186, 5
    %v1188 = vand.u32 %v1186, 31
    %v1189 = vsub.s32 32, %v1188
    %v1190 = vshrl.u32 683565275, %v1189
    %v1191 = vshll.u32 683565275, %v1188
    %v1192 = vshrl.u32 2475754826, %v1189
    %v1193 = vor.u32 %v1191, %v1192
    %v1194 = vshll.u32 2475754826, %v1188
    %v1195 = vshrl.u32 2131351028, %v1189
    %v1196 = vor.u32 %v1194, %v1195
    %v1197 = vshll.u32 2131351028, %v1188
    %v1198 = vshrl.u32 2102212464, %v1189
    %v1199 = vor.u32 %v1197, %v1198
    %v1200 = vshll.u32 2102212464, %v1188
    %v1201 = vshrl.u32 920167782, %v1189
    %v1202 = vor.u32 %v1200, %v1201
    %v1203 = vshll.u32 920167782, %v1188
    %v1204 = vshrl.u32 1326507024, %v1189
    %v1205 = vor.u32 %v1203, %v1204
    %vm1206 = vcmp.lt.s32.totalorder %v1187, 1
    %vm1207 = vcmp.lt.s32.totalorder %v1187, 2
    %vm1208 = vcmp.lt.s32.totalorder %v1187, 3
    %vm1209 = vcmp.lt.s32.totalorder %v1187, 4
    %v1210 = vsel %vm1206, %v1190, %v1193
    %v1211 = vsel %vm1209, %v1199, 2102212464
    %v1212 = vsel %vm1208, %v1196, %v1211
    %v1213 = vsel %vm1207, %v1210, %v1212
    %v1214 = vsel %vm1206, %v1193, %v1196
    %v1215 = vsel %vm1209, %v1202, 920167782
    %v1216 = vsel %vm1208, %v1199, %v1215
    %v1217 = vsel %vm1207, %v1214, %v1216
    %v1218 = vsel %vm1206, %v1196, %v1199
    %v1219 = vsel %vm1209, %v1205, 1326507024
    %v1220 = vsel %vm1208, %v1202, %v1219
    %v1221 = vsel %vm1207, %v1218, %v1220
    %v1222 = vshll.u32 %v1182, 8
    %v1223 = vmul.u32.u64.compose %v1222, %v1221
    %v1224 = vextract.low.u32 %v1223
    %v1225 = vextract.high.u32 %v1223
    %v1226 = vmul.u32.u64.compose %v1222, %v1217
    %v1227 = vextract.low.u32 %v1226
    %v1228 = vextract.high.u32 %v1226
    %v1229 = vmul.u32 %v1222, %v1213
    %v1230 = vadd.s32 %v1225, %v1227
    %vm1231 = vc.u32 %v1225, %v1227
    %v1232 = vadd.s32 %v1228, 1
    %v1233 = vsel %vm1231, %v1232, %v1228
    %v1234 = vadd.s32 %v1229, %v1233
    %v1235 = vadd.s32 %v1234, 536870912
    %v1236 = vshrl.u32 %v1235, 30
    %v1237 = vshll.u32 %v1236, 30
    %v1238 = vsub.s32 %v1234, %v1237
    %vm1239 = vcmp.lt.s32.totalorder %v1238, 0
    %v1240 = vsub.s32 0, %v1238
    %v1241 = vsel %vm1239, %v1240, %v1238
    %v1242 = vclz %v1241
    %v1243 = vsub.s32 %v1242, 2
    %vm1244 = vcmp.gt.s32.totalorder 0, %v1243
    %v1245 = vsel %vm1244, 0, %v1243
    %v1246 = vsub.s32 32, %v1245
    %v1247 = vshll.u32 %v1238, %v1245
    %v1248 = vshrl.u32 %v1230, %v1246
    %v1249 = vor.u32 %v1247, %v1248
    %v1250 = vsub.s32 4294967266, %v1245
    %v1251 = vadd.s32 %v1250, 127
    %v1252 = vshll.u32 %v1251, 23
    %v1253 = vor.u32 4788187, %v1252
    %v1254 = vand.u32 2147483647, %v1253
    %v1256 = vcvt.s32.f32 %v1249
    %v1257 = vmul.f32 %v1256, %v1254
    %v1258 = vxor.u32 %v1257, 2147483648
    %v1259 = vsel %vm1176, %v1258, %v1257
    %v1260 = vsub.s32 4, %v1236
    %v1261 = vsel %vm1176, %v1260, %v1236
    %v1262 = vsel %vm1175, %v1070, %v1259
    %v1263 = vsel %vm1175, 0, %v1261
    %v1264 = vcosq.f32.pop %v1262
    %v1265 = vsinq.f32.pop %v1262
    %vm1266 = vweird.f32 %v1070
    %v1267 = vadd.s32 %v1263, 3
    %v1268 = vand.u32 %v1267, 3
    %vm1269 = vcmp.lt.s32.totalorder %v1268, 2
    %vm1270 = vcmp.eq.s32.totalorder %v1268, 0
    %v1271 = vxor.u32 %v1265, 2147483648
    %v1272 = vsel %vm1270, %v1264, %v1271
    %vm1273 = vcmp.eq.s32.totalorder %v1268, 2
    %v1274 = vxor.u32 %v1264, 2147483648
    %v1275 = vsel %vm1273, %v1274, %v1265
    %v1276 = vsel %vm1269, %v1272, %v1275
    %v1277 = vsel %vm1266, nan, %v1276
    %s1278 = sld [smem:[#allocation6 + $0x5]]
    %s1279 = sld [smem:[#allocation7 + $0x5]]
    %v1280 = vstv %s1278
    %v1281 = vmul.f32 %v1173, %v1280
    %v1282 = vstv %s1279
    %v1283 = vmul.f32 %v1277, %v1282
    %v1284 = vsub.f32 %v1281, %v1283
    %v1285 = vmul.f32 %v1277, %v1280
    %v1286 = vmul.f32 %v1173, %v1282
    %v1287 = vadd.f32 %v1285, %v1286
    %v1288 = vadd.f32 %v1281, %v1283
    %v1289 = vsub.f32 %v1285, %v1286
    %v1290 = vmul.f32 %v958, %v1284
    %v1291 = vmul.f32 %v958, %v1287
    %v1292 = vmul.f32 %v1062, %v1288
    %v1293 = vmul.f32 %v1062, %v1289
    %v1294 = vmul.f32 %v1290, %v798
    %v1295 = vmul.f32 %v1291, %v805
    %v1296 = vsub.f32 %v1294, %v1295
    %v1297 = vmul.f32 %v1292, %v826
    %v1298 = vsub.f32 %v1296, %v1297
    %v1299 = vmul.f32 %v1293, %v833
    %v1300 = vadd.f32 %v1298, %v1299
    %v1301 = vmul.f32 %v1290, %v805
    %v1302 = vmul.f32 %v1291, %v798
    %v1303 = vadd.f32 %v1301, %v1302
    %v1304 = vmul.f32 %v1292, %v833
    %v1305 = vsub.f32 %v1303, %v1304
    %v1306 = vmul.f32 %v1293, %v826
    %v1307 = vsub.f32 %v1305, %v1306
    %v1308 = vmul.f32 %v1290, %v812
    %v1309 = vmul.f32 %v1291, %v819
    %v1310 = vsub.f32 %v1308, %v1309
    %v1311 = vmul.f32 %v1292, %v840
    %v1312 = vsub.f32 %v1310, %v1311
    %v1313 = vmul.f32 %v1293, %v847
    %v1314 = vadd.f32 %v1312, %v1313
    %v1315 = vmul.f32 %v1290, %v819
    %v1316 = vmul.f32 %v1291, %v812
    %v1317 = vadd.f32 %v1315, %v1316
    %v1318 = vmul.f32 %v1292, %v847
    %v1319 = vsub.f32 %v1317, %v1318
    %v1320 = vmul.f32 %v1293, %v840
    %v1321 = vsub.f32 %v1319, %v1320
    %v1322 = vmul.f32 %v1292, %v798
    %v1323 = vmul.f32 %v1293, %v805
    %v1324 = vadd.f32 %v1322, %v1323
    %v1325 = vmul.f32 %v1290, %v826
    %v1326 = vadd.f32 %v1324, %v1325
    %v1327 = vmul.f32 %v1291, %v833
    %v1328 = vadd.f32 %v1326, %v1327
    %v1329 = vmul.f32 %v1292, %v805
    %v1330 = vmul.f32 %v1293, %v798
    %v1331 = vsub.f32 %v1329, %v1330
    %v1332 = vmul.f32 %v1290, %v833
    %v1333 = vadd.f32 %v1331, %v1332
    %v1334 = vmul.f32 %v1291, %v826
    %v1335 = vsub.f32 %v1333, %v1334
    %v1336 = vmul.f32 %v1292, %v812
    %v1337 = vmul.f32 %v1293, %v819
    %v1338 = vadd.f32 %v1336, %v1337
    %v1339 = vmul.f32 %v1290, %v840
    %v1340 = vadd.f32 %v1338, %v1339
    %v1341 = vmul.f32 %v1291, %v847
    %v1342 = vadd.f32 %v1340, %v1341
    %v1343 = vmul.f32 %v1292, %v819
    %v1344 = vmul.f32 %v1293, %v812
    %v1345 = vsub.f32 %v1343, %v1344
    %v1346 = vmul.f32 %v1290, %v847
    %v1347 = vadd.f32 %v1345, %v1346
    %v1348 = vmul.f32 %v1291, %v840
    %v1349 = vsub.f32 %v1347, %v1348
    %v1350 = vmul.f32 %v1290, %v1300
    %v1351 = vmul.f32 %v1291, %v1307
    %v1352 = vadd.f32 %v1350, %v1351
    %v1353 = vmul.f32 %v1292, %v1314
    %v1354 = vsub.f32 %v1352, %v1353
    %v1355 = vmul.f32 %v1293, %v1321
    %v1356 = vsub.f32 %v1354, %v1355
    %v1357 = vmul.f32 %v1290, %v1307
    %v1358 = vmul.f32 %v1291, %v1300
    %v1359 = vsub.f32 %v1357, %v1358
    %v1360 = vmul.f32 %v1292, %v1321
    %v1361 = vsub.f32 %v1359, %v1360
    %v1362 = vmul.f32 %v1293, %v1314
    %v1363 = vadd.f32 %v1361, %v1362
    %v1364 = vmul.f32 %v1292, %v1300
    %v1365 = vmul.f32 %v1293, %v1307
    %v1366 = vsub.f32 %v1364, %v1365
    %v1367 = vmul.f32 %v1290, %v1314
    %v1368 = vadd.f32 %v1366, %v1367
    %v1369 = vmul.f32 %v1291, %v1321
    %v1370 = vsub.f32 %v1368, %v1369
    %v1371 = vmul.f32 %v1292, %v1307
    %v1372 = vmul.f32 %v1293, %v1300
    %v1373 = vadd.f32 %v1371, %v1372
    %v1374 = vmul.f32 %v1290, %v1321
    %v1375 = vadd.f32 %v1373, %v1374
    %v1376 = vmul.f32 %v1291, %v1314
    %v1377 = vadd.f32 %v1375, %v1376
    %v1378 = vmul.f32 %v1290, %v1328
    %v1379 = vmul.f32 %v1291, %v1335
    %v1380 = vadd.f32 %v1378, %v1379
    %v1381 = vmul.f32 %v1292, %v1342
    %v1382 = vsub.f32 %v1380, %v1381
    %v1383 = vmul.f32 %v1293, %v1349
    %v1384 = vsub.f32 %v1382, %v1383
    %v1385 = vmul.f32 %v1290, %v1335
    %v1386 = vmul.f32 %v1291, %v1328
    %v1387 = vsub.f32 %v1385, %v1386
    %v1388 = vmul.f32 %v1292, %v1349
    %v1389 = vsub.f32 %v1387, %v1388
    %v1390 = vmul.f32 %v1293, %v1342
    %v1391 = vadd.f32 %v1389, %v1390
    %v1392 = vmul.f32 %v1292, %v1328
    %v1393 = vmul.f32 %v1293, %v1335
    %v1394 = vsub.f32 %v1392, %v1393
    %v1395 = vmul.f32 %v1290, %v1342
    %v1396 = vadd.f32 %v1394, %v1395
    %v1397 = vmul.f32 %v1291, %v1349
    %v1398 = vsub.f32 %v1396, %v1397
    %v1399 = vmul.f32 %v1292, %v1335
    %v1400 = vmul.f32 %v1293, %v1328
    %v1401 = vadd.f32 %v1399, %v1400
    %v1402 = vmul.f32 %v1290, %v1349
    %v1403 = vadd.f32 %v1401, %v1402
    %v1404 = vmul.f32 %v1291, %v1342
    %v1405 = vadd.f32 %v1403, %v1404
    %1406 = vst [vmem:[%s6] sm:$0xff] %v1356
    %s1407 = scalar_lea.vmem %s6, 8
    %1408 = vst [vmem:[%s1407] sm:$0xff] %v1370
    %s1409 = scalar_lea.vmem %s6, 16
    %1410 = vst [vmem:[%s1409] sm:$0xff] %v1384
    %s1411 = scalar_lea.vmem %s6, 24
    %1412 = vst [vmem:[%s1411] sm:$0xff] %v1398
    %s1413 = scalar_lea.vmem %s6, 32
    %1414 = vst [vmem:[%s1413] sm:$0xff] %v1363
    %s1415 = scalar_lea.vmem %s6, 40
    %1416 = vst [vmem:[%s1415] sm:$0xff] %v1377
    %s1417 = scalar_lea.vmem %s6, 48
    %1418 = vst [vmem:[%s1417] sm:$0xff] %v1391
    %s1419 = scalar_lea.vmem %s6, 56
    %1420 = vst [vmem:[%s1419] sm:$0xff] %v1405
    // Predicated region
    $region42: #{_qlayer_forward_impl.1} parent=1 // pred_check
      _
    $region43: #{_qlayer_forward_impl.1} parent=1 // pred_check_branch
      %1422 = sbr.rel (0) target = $region45
    $region44: #{_qlayer_forward_impl.1} parent=1 // pred_region
      _
    $region45: #{_qlayer_forward_impl.1} parent=1 // pred_fallthru
      _
    // Predicated region
    $region46: #{_qlayer_forward_impl.1} parent=1 // pred_check
      _
    $region47: #{_qlayer_forward_impl.1} parent=1 // pred_check_branch
      %1424 = sbr.rel (0) target = $region49
    $region48: #{_qlayer_forward_impl.1} parent=1 // pred_region
      _
    $region49: #{_qlayer_forward_impl.1} parent=1 // pred_fallthru
      _
    %1425 = vsyncpa [#allocation3], 1
    %1426 = vsyncpa [#allocation5], 1
    %1427 = vsyncpa [#allocation8], 1

</llo_original>
